<compile_context>
chip_gen: v6e
topology: v6e:2x2x1
jax: 0.10.0
libtpu: 0.0.40
codegen_flags: <defaults>
</compile_context>

<pallas_src>
import functools

import jax
import jax.numpy as jnp
from jax.experimental import pallas as pl
from jax.experimental.pallas import tpu as pltpu


PARAM_ORDER = (
    "cw1", "cb1", "cw2", "cb2", "cw3", "cb3",
    "sw1", "sb1", "sw2", "sb2", "sw3", "sb3",
    "pw", "pb",
    "fw1", "fb1", "fw2", "fb2", "fw3", "fb3", "fw4", "fb4",
    "mw", "mb", "lw", "lb",
)


# -----------------------------------------------------------------------------
# The single fused Pallas kernel: full StochasticPolicy forward.
# -----------------------------------------------------------------------------
def _policy_kernel(img_ref, st_ref, eps_ref,
                   cw1, cb1, cw2, cb2, cw3, cb3,
                   sw1, sb1, sw2, sb2, sw3, sb3,
                   pw, pb, fw1, fb1, fw2, fb2, fw3, fb3, fw4, fb4,
                   mw, mb, lw, lb,
                   a_ref, mu_ref, std_ref, ent_ref,
                   *, std_mult):
    dot = lambda x, w: jnp.dot(x, w[...], preferred_element_type=jnp.float32)
    leaky = lambda v: jnp.maximum(v, 0.2 * v)     # LeakyReLU(0.2)
    relu = lambda v: jnp.maximum(v, 0.0)

    # f_encoder: Conv/Dropout/LeakyReLU x2, Conv  (convs pre-linearised to
    # dense NCHW-flat operators at init; conv3 has no activation).
    h = leaky(dot(img_ref[...], cw1) + cb1[...])
    h = leaky(dot(h, cw2) + cb2[...])
    h = dot(h, cw3) + cb3[...]                    # (B, hsize), NCHW-flat order

    # s_encoder: Linear/Dropout/LeakyReLU x2, Linear; residual add onto h.
    s = leaky(dot(st_ref[...], sw1) + sb1[...])
    s = leaky(dot(s, sw2) + sb2[...])
    h = h + dot(s, sw3) + sb3[...]

    # proj + fc (Linear/ReLU x3 then Linear, no final ReLU).
    h = dot(h, pw) + pb[...]
    h = relu(dot(h, fw1) + fb1[...])
    h = relu(dot(h, fw2) + fb2[...])
    h = relu(dot(h, fw3) + fb3[...])
    h = dot(h, fw4) + fb4[...]

    # Stochastic head: mu, clamped logvar, std, reparameterised sample, entropy.
    mu = dot(h, mw) + mb[...]
    logvar = jnp.minimum(dot(h, lw) + lb[...], 4.0)   # torch.clamp(max=4.0)
    std = jnp.exp(0.5 * logvar)

    mu_ref[...] = mu
    std_ref[...] = std
    ent_ref[...] = jnp.mean(std, keepdims=True)       # entropy = std.mean()
    # eps: (n_samples, B, n_out); broadcast mu/std across samples.
    a_ref[...] = eps_ref[...] * std[None] * std_mult + mu[None]


def stochastic_policy_forward(params, state_images, states, eps, opt, std_mult=1.0):
    B = state_images.shape[0]
    n_out = opt["n_actions"]
    n_samples = eps.shape[0]
    cin = 3 * opt["ncond"]
    # Matches torch: images.view(B, ncond*3, H, W) flattened NCHW (contiguous).
    img_flat = state_images.reshape(B, cin * opt["height"] * opt["width"])
    st_flat = states.reshape(B, -1)
    weights = [params[k] for k in PARAM_ORDER]

    vmem = pl.BlockSpec(memory_space=pltpu.MemorySpace.VMEM)
    a, mu, std, ent = pl.pallas_call(
        functools.partial(_policy_kernel, std_mult=std_mult),
        out_shape=(
            jax.ShapeDtypeStruct((n_samples, B, n_out), jnp.float32),
            jax.ShapeDtypeStruct((B, n_out), jnp.float32),
            jax.ShapeDtypeStruct((B, n_out), jnp.float32),
            jax.ShapeDtypeStruct((1, 1), jnp.float32),
        ),
        in_specs=[vmem] * (3 + len(weights)),
        out_specs=(vmem, vmem, vmem, vmem),
    )(img_flat, st_flat, eps, *weights)

    a = jnp.squeeze(jnp.transpose(a, (1, 0, 2)))   # (B, n_samples, n_out).squeeze()
    entropy = ent[0, 0]
    return a, entropy, mu, std


# -----------------------------------------------------------------------------
# Parameter prep (all layout work done ONCE at init time).
# -----------------------------------------------------------------------------
def _conv_as_dense(w, in_shape):
    """Exact linearisation of Conv2d(k=4, s=2, p=1) as a dense (in_flat, out_flat)
    matrix, built by applying the conv to the identity basis of the NCHW-flat
    input.  Init-time only; the forward pass never calls lax.conv."""
    C, H, W = in_shape
    eye = jnp.eye(C * H * W, dtype=jnp.float32).reshape(C * H * W, C, H, W)
    out = jax.lax.conv_general_dilated(
        eye, w, (2, 2), ((1, 1), (1, 1)),
        dimension_numbers=("NCHW", "OIHW", "NCHW"),
        precision=jax.lax.Precision.HIGHEST)
    O, Ho, Wo = out.shape[1], out.shape[2], out.shape[3]
    return out.reshape(C * H * W, O * Ho * Wo), (O, Ho, Wo)


def prepare_params(raw, opt):
    cin = 3 * opt["ncond"]
    cw1, sh1 = _conv_as_dense(raw["cw1"], (cin, opt["height"], opt["width"]))
    cw2, sh2 = _conv_as_dense(raw["cw2"], sh1)
    cw3, sh3 = _conv_as_dense(raw["cw3"], sh2)
    rep = lambda b, sh: jnp.repeat(b, sh[1] * sh[2]).reshape(1, -1)  # NCHW-flat bias
    p = dict(
        cw1=cw1, cb1=rep(raw["cb1"], sh1),
        cw2=cw2, cb2=rep(raw["cb2"], sh2),
        cw3=cw3, cb3=rep(raw["cb3"], sh3),
    )
    for k in ("sw1", "sw2", "sw3", "pw", "fw1", "fw2", "fw3", "fw4", "mw", "lw"):
        p[k] = raw[k]
    for k in ("sb1", "sb2", "sb3", "pb", "fb1", "fb2", "fb3", "fb4", "mb", "lb"):
        p[k] = raw[k].reshape(1, -1)
    return p


def init_params(key, opt):
    nf = opt["nfeature"]
    fm = (nf // 4, nf // 2, nf)
    cin = 3 * opt["ncond"]
    nh_enc = fm[-1]
    s_in = 4 * opt["ncond"]                       # state_input_size * n_inputs
    nh = opt["n_hidden"]
    n_out = opt["n_actions"]

    keys = iter(jax.random.split(key, 40))
    w = lambda shape: 0.05 * jax.random.normal(next(keys), shape, jnp.float32)

    return dict(
        # conv weights, torch OIHW layout (linearised later in prepare_params)
        cw1=w((fm[0], cin, 4, 4)),   cb1=w((fm[0],)),
        cw2=w((fm[1], fm[0], 4, 4)), cb2=w((fm[1],)),
        cw3=w((fm[2], fm[1], 4, 4)), cb3=w((fm[2],)),
        # s_encoder linears, stored (in, out)
        sw1=w((s_in, nh_enc)),         sb1=w((nh_enc,)),
        sw2=w((nh_enc, nh_enc)),       sb2=w((nh_enc,)),
        sw3=w((nh_enc, opt["hidden_size"])), sb3=w((opt["hidden_size"],)),
        # proj + fc + heads, stored (in, out)
        pw=w((opt["hidden_size"], nh)), pb=w((nh,)),
        fw1=w((nh, nh)), fb1=w((nh,)),
        fw2=w((nh, nh)), fb2=w((nh,)),
        fw3=w((nh, nh)), fb3=w((nh,)),
        fw4=w((nh, nh)), fb4=w((nh,)),
        mw=w((nh, n_out)), mb=w((n_out,)),
        lw=w((nh, n_out)), lb=w((n_out,)),
    )


# -----------------------------------------------------------------------------
# Pure-JAX reference (correctness check only; uses the raw torch-layout params).
# -----------------------------------------------------------------------------
def reference_forward(raw, state_images, states, eps, opt, std_mult=1.0):
    B = state_images.shape[0]
    x = state_images.reshape(B, 3 * opt["ncond"], opt["height"], opt["width"])

    def conv(v, w, b):
        y = jax.lax.conv_general_dilated(
            v, w, (2, 2), ((1, 1), (1, 1)),
            dimension_numbers=("NCHW", "OIHW", "NCHW"),
            precision=jax.lax.Precision.HIGHEST)
        return y + b.reshape(1, -1, 1, 1)

    lrelu = lambda v: jnp.where(v > 0, v, 0.2 * v)
    relu = lambda v: jnp.maximum(v, 0.0)
    h = lrelu(conv(x, raw["cw1"], raw["cb1"]))
    h = lrelu(conv(h, raw["cw2"], raw["cb2"]))
    h = conv(h, raw["cw3"], raw["cb3"])
    s = states.reshape(B, -1)
    s = lrelu(s @ raw["sw1"] + raw["sb1"])
    s = lrelu(s @ raw["sw2"] + raw["sb2"])
    s = s @ raw["sw3"] + raw["sb3"]
    h = h.reshape(B, -1) + s
    h = h @ raw["pw"] + raw["pb"]
    h = relu(h @ raw["fw1"] + raw["fb1"])
    h = relu(h @ raw["fw2"] + raw["fb2"])
    h = relu(h @ raw["fw3"] + raw["fb3"])
    h = h @ raw["fw4"] + raw["fb4"]
    mu = h @ raw["mw"] + raw["mb"]
    logvar = jnp.minimum(h @ raw["lw"] + raw["lb"], 4.0)
    std = jnp.exp(0.5 * logvar)
    a = eps * std[None] * std_mult + mu[None]          # (n_samples, B, n_out)
    a = jnp.squeeze(jnp.transpose(a, (1, 0, 2)))
    return a, jnp.mean(std), mu, std


if __name__ == "__main__":
    # opt consistent with layers=3: h_height = height/8, hidden_size = hsize.
    opt = dict(ncond=2, layers=3, nfeature=8, dropout=0.0,
               height=16, width=16, h_height=2, h_width=2,
               hidden_size=8 * 2 * 2, n_hidden=32, n_actions=2)
    # TODO(synk): training-mode dropout, normalize_inputs/outputs (stats buffers),
    # context_encoder (context_dim>0) and actor_critic value head are not
    # implemented (they are all disabled under the default forward arguments).

    key = jax.random.PRNGKey(0)
    kp, ki, ks, ke = jax.random.split(key, 4)
    raw = init_params(kp, opt)
    params = prepare_params(raw, opt)

    B, n_samples = 2, 1
    state_images = jax.random.normal(
        ki, (B, opt["ncond"], 3, opt["height"], opt["width"]), jnp.float32)
    states = jax.random.normal(ks, (B, opt["ncond"], 4), jnp.float32)
    # eps replaces torch.randn inside forward (explicit input; same for ref).
    eps = jax.random.normal(ke, (n_samples, B, opt["n_actions"]), jnp.float32)

    fwd = jax.jit(lambda p, si, st, e: stochastic_policy_forward(p, si, st, e, opt))
    a, entropy, mu, std = fwd(params, state_images, states, eps)
    jax.block_until_ready((a, entropy, mu, std))

    assert a.shape == (B, opt["n_actions"]), a.shape
    assert mu.shape == (B, opt["n_actions"]) and std.shape == (B, opt["n_actions"])

    ra, re, rm, rs = reference_forward(raw, state_images, states, eps, opt)
    # Tolerance is intentional: in-kernel dots use the MXU's default f32 path,
    # while the reference uses Precision.HIGHEST.
    tol = dict(rtol=1e-2, atol=2e-3)
    assert jnp.all(jnp.isfinite(a)) and bool(jnp.isfinite(entropy))
    assert jnp.allclose(mu, rm, **tol), (mu, rm)
    assert jnp.allclose(std, rs, **tol), (std, rs)
    assert jnp.allclose(a, ra, **tol), (a, ra)
    assert jnp.allclose(entropy, re, **tol), (entropy, re)

    print("KERNEL_OK")
</pallas_src>

<mosaic_0001>
module attributes {stable_mosaic.version = 11 : i64} {
  func.func @_policy_kernel(%arg0: memref<2x1536xf32, #tpu.memory_space<vmem>>, %arg1: memref<2x8xf32, #tpu.memory_space<vmem>>, %arg2: memref<1x2x2xf32, #tpu.memory_space<vmem>>, %arg3: memref<1536x128xf32, #tpu.memory_space<vmem>>, %arg4: memref<1x128xf32, #tpu.memory_space<vmem>>, %arg5: memref<128x64xf32, #tpu.memory_space<vmem>>, %arg6: memref<1x64xf32, #tpu.memory_space<vmem>>, %arg7: memref<64x32xf32, #tpu.memory_space<vmem>>, %arg8: memref<1x32xf32, #tpu.memory_space<vmem>>, %arg9: memref<8x8xf32, #tpu.memory_space<vmem>>, %arg10: memref<1x8xf32, #tpu.memory_space<vmem>>, %arg11: memref<8x8xf32, #tpu.memory_space<vmem>>, %arg12: memref<1x8xf32, #tpu.memory_space<vmem>>, %arg13: memref<8x32xf32, #tpu.memory_space<vmem>>, %arg14: memref<1x32xf32, #tpu.memory_space<vmem>>, %arg15: memref<32x32xf32, #tpu.memory_space<vmem>>, %arg16: memref<1x32xf32, #tpu.memory_space<vmem>>, %arg17: memref<32x32xf32, #tpu.memory_space<vmem>>, %arg18: memref<1x32xf32, #tpu.memory_space<vmem>>, %arg19: memref<32x32xf32, #tpu.memory_space<vmem>>, %arg20: memref<1x32xf32, #tpu.memory_space<vmem>>, %arg21: memref<32x32xf32, #tpu.memory_space<vmem>>, %arg22: memref<1x32xf32, #tpu.memory_space<vmem>>, %arg23: memref<32x32xf32, #tpu.memory_space<vmem>>, %arg24: memref<1x32xf32, #tpu.memory_space<vmem>>, %arg25: memref<32x2xf32, #tpu.memory_space<vmem>>, %arg26: memref<1x2xf32, #tpu.memory_space<vmem>>, %arg27: memref<32x2xf32, #tpu.memory_space<vmem>>, %arg28: memref<1x2xf32, #tpu.memory_space<vmem>>, %arg29: memref<1x2x2xf32, #tpu.memory_space<vmem>>, %arg30: memref<2x2xf32, #tpu.memory_space<vmem>>, %arg31: memref<2x2xf32, #tpu.memory_space<vmem>>, %arg32: memref<1x1xf32, #tpu.memory_space<vmem>>) attributes {dimension_semantics = [], scalar_prefetch = 0 : i64, scratch_operands = 0 : i64, tpu.core_type = #tpu.core_type<tc>} {
    %c0 = arith.constant 0 : index
    %c0_0 = arith.constant 0 : index
    %0 = vector.load %arg0[%c0, %c0_0] : memref<2x1536xf32, #tpu.memory_space<vmem>>, vector<2x1536xf32>
    %c0_1 = arith.constant 0 : index
    %c0_2 = arith.constant 0 : index
    %1 = vector.load %arg3[%c0_1, %c0_2] : memref<1536x128xf32, #tpu.memory_space<vmem>>, vector<1536x128xf32>
    %cst = arith.constant dense<0.000000e+00> : vector<2x128xf32>
    %2 = tpu.matmul %0, %1, %cst {dimension_numbers = #tpu.dot_dimension_numbers<[1], [0], [0], [1], [0, 0, 1, 1], [], []>} : vector<2x1536xf32>, vector<1536x128xf32>, vector<2x128xf32> -> vector<2x128xf32>
    %c0_3 = arith.constant 0 : index
    %c0_4 = arith.constant 0 : index
    %3 = vector.load %arg4[%c0_3, %c0_4] : memref<1x128xf32, #tpu.memory_space<vmem>>, vector<1x128xf32>
    %4 = vector.broadcast %3 : vector<1x128xf32> to vector<2x128xf32>
    %5 = arith.addf %2, %4 : vector<2x128xf32>
    %cst_5 = arith.constant 2.000000e-01 : f32
    %6 = vector.broadcast %cst_5 : f32 to vector<2x128xf32>
    %7 = arith.mulf %6, %5 : vector<2x128xf32>
    %8 = arith.maximumf %5, %7 : vector<2x128xf32>
    %c0_6 = arith.constant 0 : index
    %c0_7 = arith.constant 0 : index
    %9 = vector.load %arg5[%c0_6, %c0_7] : memref<128x64xf32, #tpu.memory_space<vmem>>, vector<128x64xf32>
    %cst_8 = arith.constant dense<0.000000e+00> : vector<2x64xf32>
    %10 = tpu.matmul %8, %9, %cst_8 {dimension_numbers = #tpu.dot_dimension_numbers<[1], [0], [0], [1], [0, 0, 1, 1], [], []>} : vector<2x128xf32>, vector<128x64xf32>, vector<2x64xf32> -> vector<2x64xf32>
    %c0_9 = arith.constant 0 : index
    %c0_10 = arith.constant 0 : index
    %11 = vector.load %arg6[%c0_9, %c0_10] : memref<1x64xf32, #tpu.memory_space<vmem>>, vector<1x64xf32>
    %12 = vector.broadcast %11 : vector<1x64xf32> to vector<2x64xf32>
    %13 = arith.addf %10, %12 : vector<2x64xf32>
    %cst_11 = arith.constant 2.000000e-01 : f32
    %14 = vector.broadcast %cst_11 : f32 to vector<2x64xf32>
    %15 = arith.mulf %14, %13 : vector<2x64xf32>
    %16 = arith.maximumf %13, %15 : vector<2x64xf32>
    %c0_12 = arith.constant 0 : index
    %c0_13 = arith.constant 0 : index
    %17 = vector.load %arg7[%c0_12, %c0_13] : memref<64x32xf32, #tpu.memory_space<vmem>>, vector<64x32xf32>
    %cst_14 = arith.constant dense<0.000000e+00> : vector<2x32xf32>
    %18 = tpu.matmul %16, %17, %cst_14 {dimension_numbers = #tpu.dot_dimension_numbers<[1], [0], [0], [1], [0, 0, 1, 1], [], []>} : vector<2x64xf32>, vector<64x32xf32>, vector<2x32xf32> -> vector<2x32xf32>
    %c0_15 = arith.constant 0 : index
    %c0_16 = arith.constant 0 : index
    %19 = vector.load %arg8[%c0_15, %c0_16] : memref<1x32xf32, #tpu.memory_space<vmem>>, vector<1x32xf32>
    %20 = vector.broadcast %19 : vector<1x32xf32> to vector<2x32xf32>
    %21 = arith.addf %18, %20 : vector<2x32xf32>
    %c0_17 = arith.constant 0 : index
    %c0_18 = arith.constant 0 : index
    %22 = vector.load %arg1[%c0_17, %c0_18] : memref<2x8xf32, #tpu.memory_space<vmem>>, vector<2x8xf32>
    %c0_19 = arith.constant 0 : index
    %c0_20 = arith.constant 0 : index
    %23 = vector.load %arg9[%c0_19, %c0_20] : memref<8x8xf32, #tpu.memory_space<vmem>>, vector<8x8xf32>
    %cst_21 = arith.constant dense<0.000000e+00> : vector<2x8xf32>
    %24 = tpu.matmul %22, %23, %cst_21 {dimension_numbers = #tpu.dot_dimension_numbers<[1], [0], [0], [1], [0, 0, 1, 1], [], []>} : vector<2x8xf32>, vector<8x8xf32>, vector<2x8xf32> -> vector<2x8xf32>
    %c0_22 = arith.constant 0 : index
    %c0_23 = arith.constant 0 : index
    %25 = vector.load %arg10[%c0_22, %c0_23] : memref<1x8xf32, #tpu.memory_space<vmem>>, vector<1x8xf32>
    %26 = vector.broadcast %25 : vector<1x8xf32> to vector<2x8xf32>
    %27 = arith.addf %24, %26 : vector<2x8xf32>
    %cst_24 = arith.constant 2.000000e-01 : f32
    %28 = vector.broadcast %cst_24 : f32 to vector<2x8xf32>
    %29 = arith.mulf %28, %27 : vector<2x8xf32>
    %30 = arith.maximumf %27, %29 : vector<2x8xf32>
    %c0_25 = arith.constant 0 : index
    %c0_26 = arith.constant 0 : index
    %31 = vector.load %arg11[%c0_25, %c0_26] : memref<8x8xf32, #tpu.memory_space<vmem>>, vector<8x8xf32>
    %cst_27 = arith.constant dense<0.000000e+00> : vector<2x8xf32>
    %32 = tpu.matmul %30, %31, %cst_27 {dimension_numbers = #tpu.dot_dimension_numbers<[1], [0], [0], [1], [0, 0, 1, 1], [], []>} : vector<2x8xf32>, vector<8x8xf32>, vector<2x8xf32> -> vector<2x8xf32>
    %c0_28 = arith.constant 0 : index
    %c0_29 = arith.constant 0 : index
    %33 = vector.load %arg12[%c0_28, %c0_29] : memref<1x8xf32, #tpu.memory_space<vmem>>, vector<1x8xf32>
    %34 = vector.broadcast %33 : vector<1x8xf32> to vector<2x8xf32>
    %35 = arith.addf %32, %34 : vector<2x8xf32>
    %cst_30 = arith.constant 2.000000e-01 : f32
    %36 = vector.broadcast %cst_30 : f32 to vector<2x8xf32>
    %37 = arith.mulf %36, %35 : vector<2x8xf32>
    %38 = arith.maximumf %35, %37 : vector<2x8xf32>
    %c0_31 = arith.constant 0 : index
    %c0_32 = arith.constant 0 : index
    %39 = vector.load %arg13[%c0_31, %c0_32] : memref<8x32xf32, #tpu.memory_space<vmem>>, vector<8x32xf32>
    %cst_33 = arith.constant dense<0.000000e+00> : vector<2x32xf32>
    %40 = tpu.matmul %38, %39, %cst_33 {dimension_numbers = #tpu.dot_dimension_numbers<[1], [0], [0], [1], [0, 0, 1, 1], [], []>} : vector<2x8xf32>, vector<8x32xf32>, vector<2x32xf32> -> vector<2x32xf32>
    %41 = arith.addf %21, %40 : vector<2x32xf32>
    %c0_34 = arith.constant 0 : index
    %c0_35 = arith.constant 0 : index
    %42 = vector.load %arg14[%c0_34, %c0_35] : memref<1x32xf32, #tpu.memory_space<vmem>>, vector<1x32xf32>
    %43 = vector.broadcast %42 : vector<1x32xf32> to vector<2x32xf32>
    %44 = arith.addf %41, %43 : vector<2x32xf32>
    %c0_36 = arith.constant 0 : index
    %c0_37 = arith.constant 0 : index
    %45 = vector.load %arg15[%c0_36, %c0_37] : memref<32x32xf32, #tpu.memory_space<vmem>>, vector<32x32xf32>
    %cst_38 = arith.constant dense<0.000000e+00> : vector<2x32xf32>
    %46 = tpu.matmul %44, %45, %cst_38 {dimension_numbers = #tpu.dot_dimension_numbers<[1], [0], [0], [1], [0, 0, 1, 1], [], []>} : vector<2x32xf32>, vector<32x32xf32>, vector<2x32xf32> -> vector<2x32xf32>
    %c0_39 = arith.constant 0 : index
    %c0_40 = arith.constant 0 : index
    %47 = vector.load %arg16[%c0_39, %c0_40] : memref<1x32xf32, #tpu.memory_space<vmem>>, vector<1x32xf32>
    %48 = vector.broadcast %47 : vector<1x32xf32> to vector<2x32xf32>
    %49 = arith.addf %46, %48 : vector<2x32xf32>
    %c0_41 = arith.constant 0 : index
    %c0_42 = arith.constant 0 : index
    %50 = vector.load %arg17[%c0_41, %c0_42] : memref<32x32xf32, #tpu.memory_space<vmem>>, vector<32x32xf32>
    %cst_43 = arith.constant dense<0.000000e+00> : vector<2x32xf32>
    %51 = tpu.matmul %49, %50, %cst_43 {dimension_numbers = #tpu.dot_dimension_numbers<[1], [0], [0], [1], [0, 0, 1, 1], [], []>} : vector<2x32xf32>, vector<32x32xf32>, vector<2x32xf32> -> vector<2x32xf32>
    %c0_44 = arith.constant 0 : index
    %c0_45 = arith.constant 0 : index
    %52 = vector.load %arg18[%c0_44, %c0_45] : memref<1x32xf32, #tpu.memory_space<vmem>>, vector<1x32xf32>
    %53 = vector.broadcast %52 : vector<1x32xf32> to vector<2x32xf32>
    %54 = arith.addf %51, %53 : vector<2x32xf32>
    %cst_46 = arith.constant 0.000000e+00 : f32
    %55 = vector.broadcast %cst_46 : f32 to vector<2x32xf32>
    %56 = arith.maximumf %54, %55 : vector<2x32xf32>
    %c0_47 = arith.constant 0 : index
    %c0_48 = arith.constant 0 : index
    %57 = vector.load %arg19[%c0_47, %c0_48] : memref<32x32xf32, #tpu.memory_space<vmem>>, vector<32x32xf32>
    %cst_49 = arith.constant dense<0.000000e+00> : vector<2x32xf32>
    %58 = tpu.matmul %56, %57, %cst_49 {dimension_numbers = #tpu.dot_dimension_numbers<[1], [0], [0], [1], [0, 0, 1, 1], [], []>} : vector<2x32xf32>, vector<32x32xf32>, vector<2x32xf32> -> vector<2x32xf32>
    %c0_50 = arith.constant 0 : index
    %c0_51 = arith.constant 0 : index
    %59 = vector.load %arg20[%c0_50, %c0_51] : memref<1x32xf32, #tpu.memory_space<vmem>>, vector<1x32xf32>
    %60 = vector.broadcast %59 : vector<1x32xf32> to vector<2x32xf32>
    %61 = arith.addf %58, %60 : vector<2x32xf32>
    %cst_52 = arith.constant 0.000000e+00 : f32
    %62 = vector.broadcast %cst_52 : f32 to vector<2x32xf32>
    %63 = arith.maximumf %61, %62 : vector<2x32xf32>
    %c0_53 = arith.constant 0 : index
    %c0_54 = arith.constant 0 : index
    %64 = vector.load %arg21[%c0_53, %c0_54] : memref<32x32xf32, #tpu.memory_space<vmem>>, vector<32x32xf32>
    %cst_55 = arith.constant dense<0.000000e+00> : vector<2x32xf32>
    %65 = tpu.matmul %63, %64, %cst_55 {dimension_numbers = #tpu.dot_dimension_numbers<[1], [0], [0], [1], [0, 0, 1, 1], [], []>} : vector<2x32xf32>, vector<32x32xf32>, vector<2x32xf32> -> vector<2x32xf32>
    %c0_56 = arith.constant 0 : index
    %c0_57 = arith.constant 0 : index
    %66 = vector.load %arg22[%c0_56, %c0_57] : memref<1x32xf32, #tpu.memory_space<vmem>>, vector<1x32xf32>
    %67 = vector.broadcast %66 : vector<1x32xf32> to vector<2x32xf32>
    %68 = arith.addf %65, %67 : vector<2x32xf32>
    %cst_58 = arith.constant 0.000000e+00 : f32
    %69 = vector.broadcast %cst_58 : f32 to vector<2x32xf32>
    %70 = arith.maximumf %68, %69 : vector<2x32xf32>
    %c0_59 = arith.constant 0 : index
    %c0_60 = arith.constant 0 : index
    %71 = vector.load %arg23[%c0_59, %c0_60] : memref<32x32xf32, #tpu.memory_space<vmem>>, vector<32x32xf32>
    %cst_61 = arith.constant dense<0.000000e+00> : vector<2x32xf32>
    %72 = tpu.matmul %70, %71, %cst_61 {dimension_numbers = #tpu.dot_dimension_numbers<[1], [0], [0], [1], [0, 0, 1, 1], [], []>} : vector<2x32xf32>, vector<32x32xf32>, vector<2x32xf32> -> vector<2x32xf32>
    %c0_62 = arith.constant 0 : index
    %c0_63 = arith.constant 0 : index
    %73 = vector.load %arg24[%c0_62, %c0_63] : memref<1x32xf32, #tpu.memory_space<vmem>>, vector<1x32xf32>
    %74 = vector.broadcast %73 : vector<1x32xf32> to vector<2x32xf32>
    %75 = arith.addf %72, %74 : vector<2x32xf32>
    %c0_64 = arith.constant 0 : index
    %c0_65 = arith.constant 0 : index
    %76 = vector.load %arg25[%c0_64, %c0_65] : memref<32x2xf32, #tpu.memory_space<vmem>>, vector<32x2xf32>
    %cst_66 = arith.constant dense<0.000000e+00> : vector<2x2xf32>
    %77 = tpu.matmul %75, %76, %cst_66 {dimension_numbers = #tpu.dot_dimension_numbers<[1], [0], [0], [1], [0, 0, 1, 1], [], []>} : vector<2x32xf32>, vector<32x2xf32>, vector<2x2xf32> -> vector<2x2xf32>
    %c0_67 = arith.constant 0 : index
    %c0_68 = arith.constant 0 : index
    %78 = vector.load %arg26[%c0_67, %c0_68] : memref<1x2xf32, #tpu.memory_space<vmem>>, vector<1x2xf32>
    %79 = vector.broadcast %78 : vector<1x2xf32> to vector<2x2xf32>
    %80 = arith.addf %77, %79 : vector<2x2xf32>
    %c0_69 = arith.constant 0 : index
    %c0_70 = arith.constant 0 : index
    %81 = vector.load %arg27[%c0_69, %c0_70] : memref<32x2xf32, #tpu.memory_space<vmem>>, vector<32x2xf32>
    %cst_71 = arith.constant dense<0.000000e+00> : vector<2x2xf32>
    %82 = tpu.matmul %75, %81, %cst_71 {dimension_numbers = #tpu.dot_dimension_numbers<[1], [0], [0], [1], [0, 0, 1, 1], [], []>} : vector<2x32xf32>, vector<32x2xf32>, vector<2x2xf32> -> vector<2x2xf32>
    %c0_72 = arith.constant 0 : index
    %c0_73 = arith.constant 0 : index
    %83 = vector.load %arg28[%c0_72, %c0_73] : memref<1x2xf32, #tpu.memory_space<vmem>>, vector<1x2xf32>
    %84 = vector.broadcast %83 : vector<1x2xf32> to vector<2x2xf32>
    %85 = arith.addf %82, %84 : vector<2x2xf32>
    %cst_74 = arith.constant 4.000000e+00 : f32
    %86 = vector.broadcast %cst_74 : f32 to vector<2x2xf32>
    %87 = arith.minimumf %85, %86 : vector<2x2xf32>
    %cst_75 = arith.constant 5.000000e-01 : f32
    %88 = vector.broadcast %cst_75 : f32 to vector<2x2xf32>
    %89 = arith.mulf %88, %87 : vector<2x2xf32>
    %90 = math.exp %89 : vector<2x2xf32>
    %c0_76 = arith.constant 0 : index
    %c0_77 = arith.constant 0 : index
    %91 = vector.load %arg30[%c0_76, %c0_77] : memref<2x2xf32, #tpu.memory_space<vmem>>, vector<2x2xf32>
    tpu.vector_store %arg30[%c0_76, %c0_77], %80 {strides = array<i32>} : memref<2x2xf32, #tpu.memory_space<vmem>>, vector<2x2xf32>,
    %c0_78 = arith.constant 0 : index
    %c0_79 = arith.constant 0 : index
    %92 = vector.load %arg31[%c0_78, %c0_79] : memref<2x2xf32, #tpu.memory_space<vmem>>, vector<2x2xf32>
    tpu.vector_store %arg31[%c0_78, %c0_79], %90 {strides = array<i32>} : memref<2x2xf32, #tpu.memory_space<vmem>>, vector<2x2xf32>,
    %93 = vector.shape_cast %90 : vector<2x2xf32> to vector<1x2x2xf32>
    %cst_80 = arith.constant dense<0.000000e+00> : vector<1xf32>
    %94 = vector.multi_reduction <add>, %93, %cst_80 [1, 2] : vector<1x2x2xf32> to vector<1xf32>
    %95 = vector.shape_cast %94 : vector<1xf32> to vector<1x1x1xf32>
    %96 = vector.extract %95[0, 0, 0] : f32 from vector<1x1x1xf32>
    %97 = vector.broadcast %96 : f32 to vector<1x1xf32>
    %cst_81 = arith.constant 4.000000e+00 : f32
    %98 = vector.broadcast %cst_81 : f32 to vector<1x1xf32>
    %99 = arith.divf %97, %98 : vector<1x1xf32>
    %c0_82 = arith.constant 0 : index
    %c0_83 = arith.constant 0 : index
    %100 = vector.load %arg32[%c0_82, %c0_83] : memref<1x1xf32, #tpu.memory_space<vmem>>, vector<1x1xf32>
    tpu.vector_store %arg32[%c0_82, %c0_83], %99 {strides = array<i32>} : memref<1x1xf32, #tpu.memory_space<vmem>>, vector<1x1xf32>,
    %c0_84 = arith.constant 0 : index
    %c0_85 = arith.constant 0 : index
    %c0_86 = arith.constant 0 : index
    %101 = vector.load %arg2[%c0_84, %c0_85, %c0_86] : memref<1x2x2xf32, #tpu.memory_space<vmem>>, vector<1x2x2xf32>
    %102 = vector.shape_cast %90 : vector<2x2xf32> to vector<1x2x2xf32>
    %103 = arith.mulf %101, %102 : vector<1x2x2xf32>
    %cst_87 = arith.constant 1.000000e+00 : f32
    %104 = vector.broadcast %cst_87 : f32 to vector<1x2x2xf32>
    %105 = arith.mulf %103, %104 : vector<1x2x2xf32>
    %106 = vector.shape_cast %80 : vector<2x2xf32> to vector<1x2x2xf32>
    %107 = arith.addf %105, %106 : vector<1x2x2xf32>
    %c0_88 = arith.constant 0 : index
    %c0_89 = arith.constant 0 : index
    %c0_90 = arith.constant 0 : index
    %108 = vector.load %arg29[%c0_88, %c0_89, %c0_90] : memref<1x2x2xf32, #tpu.memory_space<vmem>>, vector<1x2x2xf32>
    tpu.vector_store %arg29[%c0_88, %c0_89, %c0_90], %107 {strides = array<i32>} : memref<1x2x2xf32, #tpu.memory_space<vmem>>, vector<1x2x2xf32>,
    return
  }
}

</mosaic_0001>

<llo_original>
// kernel: _lambda_.1
$region0: #{_lambda_.1}
  #allocation0 [shape = 'u32[]', space=smem, size = 0x4, offset = 0x4, fixed_abs, tag = 'smem constant byte address 0x4 - core index']
  #allocation1 [shape = 'u32[144,128]{1,0:T(1,128)}', space=vmem, size = 0x12000, scoped, tag = 'internal scratch']
  %s0 = inlined_call_operand.smem [shape: u32[33], index: -1, kind: input, shape index: {}]
  %s1 = sld [smem:[%s0]]
  %s2 = scalar_lea.smem %s0, 1
  %s3 = sld [smem:[%s2]]
  %s4 = scalar_lea.smem %s0, 2
  %s5 = sld [smem:[%s4]]
  %s6 = scalar_lea.smem %s0, 3
  %s7 = sld [smem:[%s6]]
  %s8 = scalar_lea.smem %s0, 4
  %s9 = sld [smem:[%s8]]
  %s10 = scalar_lea.smem %s0, 5
  %s11 = sld [smem:[%s10]]
  %s12 = scalar_lea.smem %s0, 6
  %s13 = sld [smem:[%s12]]
  %s14 = scalar_lea.smem %s0, 7
  %s15 = sld [smem:[%s14]]
  %s16 = scalar_lea.smem %s0, 8
  %s17 = sld [smem:[%s16]]
  %s18 = scalar_lea.smem %s0, 9
  %s19 = sld [smem:[%s18]]
  %s20 = scalar_lea.smem %s0, 10
  %s21 = sld [smem:[%s20]]
  %s22 = scalar_lea.smem %s0, 11
  %s23 = sld [smem:[%s22]]
  %s24 = scalar_lea.smem %s0, 12
  %s25 = sld [smem:[%s24]]
  %s26 = scalar_lea.smem %s0, 13
  %s27 = sld [smem:[%s26]]
  %s28 = scalar_lea.smem %s0, 14
  %s29 = sld [smem:[%s28]]
  %s30 = scalar_lea.smem %s0, 15
  %s31 = sld [smem:[%s30]]
  %s32 = scalar_lea.smem %s0, 16
  %s33 = sld [smem:[%s32]]
  %s34 = scalar_lea.smem %s0, 17
  %s35 = sld [smem:[%s34]]
  %s36 = scalar_lea.smem %s0, 18
  %s37 = sld [smem:[%s36]]
  %s38 = scalar_lea.smem %s0, 19
  %s39 = sld [smem:[%s38]]
  %s40 = scalar_lea.smem %s0, 20
  %s41 = sld [smem:[%s40]]
  %s42 = scalar_lea.smem %s0, 21
  %s43 = sld [smem:[%s42]]
  %s44 = scalar_lea.smem %s0, 22
  %s45 = sld [smem:[%s44]]
  %s46 = scalar_lea.smem %s0, 23
  %s47 = sld [smem:[%s46]]
  %s48 = scalar_lea.smem %s0, 24
  %s49 = sld [smem:[%s48]]
  %s50 = scalar_lea.smem %s0, 25
  %s51 = sld [smem:[%s50]]
  %s52 = scalar_lea.smem %s0, 26
  %s53 = sld [smem:[%s52]]
  %s54 = scalar_lea.smem %s0, 27
  %s55 = sld [smem:[%s54]]
  %s56 = scalar_lea.smem %s0, 28
  %s57 = sld [smem:[%s56]]
  %s58 = scalar_lea.smem %s0, 29
  %s59 = sld [smem:[%s58]]
  %s60 = scalar_lea.smem %s0, 30
  %s61 = sld [smem:[%s60]]
  %s62 = scalar_lea.smem %s0, 31
  %s63 = sld [smem:[%s62]]
  %s64 = scalar_lea.smem %s0, 32
  %s65 = sld [smem:[%s64]]
  %66 = xla_tuple %s59, %s61, %s63, %s65
  %s67 = sld [smem:[#allocation0]]
  $region154: #{_lambda_.1} parent=0
    _
  %s69 = ssub.s32 1, %s67
  %s70 = scalar_select 0, %s69, %s67
  $region1: #{_lambda_.1} parent=0
    #allocation2 [shape = 'u8[786432]{0}', space=vmem, size = 0xc0000, scoped, tag = 'input window, operand 3, single buffered']
    #allocation3 [shape = 's32[1]{0}', space=sflag, size = 0x4, scoped, tag = 'scoped memory for _lambda_.1']
    #allocation4 [shape = 's32[1]{0}', space=sflag, size = 0x4, scoped, tag = 'scoped memory for _lambda_.1']
    #allocation5 [shape = 'u8[1024]{0}', space=vmem, size = 0x400, scoped, tag = 'output window, operand 0, single buffered']
    #allocation6 [shape = 'u8[1024]{0}', space=vmem, size = 0x400, scoped, tag = 'output window, operand 1, single buffered']
    #allocation7 [shape = 's32[1]{0}', space=sflag, size = 0x4, scoped, tag = 'scoped memory for _lambda_.1']
    #allocation8 [shape = 'u8[1024]{0}', space=vmem, size = 0x400, scoped, tag = 'output window, operand 2, single buffered']
    #allocation9 [shape = 'u8[512]{0}', space=vmem, size = 0x400, scoped, tag = 'output window, operand 3, single buffered']
    #allocation10 [shape = 's32[1]{0}', space=sflag, size = 0x4, scoped, tag = 'scoped memory for _lambda_.1']
    %71 = vsyncpa [#allocation3], 0
    %72 = vsyncpa [#allocation4], 0
    %73 = vsyncpa [#allocation7], 0
    %74 = vsyncpa [#allocation10], 0
    // Predicated region
    $region2: #{_lambda_.1} parent=1 // pred_check
      _
    $region3: #{_lambda_.1} parent=1 // pred_check_branch
      %76 = sbr.rel (0) target = $region5
    $region4: #{_lambda_.1} parent=1 // pred_region
      _
    $region5: #{_lambda_.1} parent=1 // pred_fallthru
      _
    // Predicated region
    $region6: #{_lambda_.1} parent=1 // pred_check
      _
    $region7: #{_lambda_.1} parent=1 // pred_check_branch
      %78 = sbr.rel (0) target = $region9
    $region8: #{_lambda_.1} parent=1 // pred_region
      _
    $region9: #{_lambda_.1} parent=1 // pred_fallthru
      _
    // Predicated region
    $region10: #{_lambda_.1} parent=1 // pred_check
      _
    $region11: #{_lambda_.1} parent=1 // pred_check_branch
      %80 = sbr.rel (0) target = $region13
    $region12: #{_lambda_.1} parent=1 // pred_region
      _
    $region13: #{_lambda_.1} parent=1 // pred_fallthru
      _
    // Predicated region
    $region14: #{_lambda_.1} parent=1 // pred_check
      _
    $region15: #{_lambda_.1} parent=1 // pred_check_branch
      %82 = sbr.rel (0) target = $region17
    $region16: #{_lambda_.1} parent=1 // pred_region
      %s84 = ssub.s32 24576, 24576
      %85 = vsyncadd [#allocation3], %s84
      %s86 = sshll.u32 [#allocation2], 4
      %s87 = int_to_ptr.vmem [resolvable:$true] %s86
      %92 = dma.hbm_to_vmem [thread:$0]  %s7, 24576, %s87, [#allocation3], 128, 128, 8
    $region17: #{_lambda_.1} parent=1 // pred_fallthru
      _
    // Predicated region
    $region18: #{_lambda_.1} parent=1 // pred_check
      _
    $region19: #{_lambda_.1} parent=1 // pred_check_branch
      %94 = sbr.rel (0) target = $region21
    $region20: #{_lambda_.1} parent=1 // pred_region
      _
    $region21: #{_lambda_.1} parent=1 // pred_fallthru
      _
    // Predicated region
    $region22: #{_lambda_.1} parent=1 // pred_check
      _
    $region23: #{_lambda_.1} parent=1 // pred_check_branch
      %96 = sbr.rel (0) target = $region25
    $region24: #{_lambda_.1} parent=1 // pred_region
      _
    $region25: #{_lambda_.1} parent=1 // pred_fallthru
      _
    // Predicated region
    $region26: #{_lambda_.1} parent=1 // pred_check
      _
    $region27: #{_lambda_.1} parent=1 // pred_check_branch
      %98 = sbr.rel (0) target = $region29
    $region28: #{_lambda_.1} parent=1 // pred_region
      _
    $region29: #{_lambda_.1} parent=1 // pred_fallthru
      _
    // Predicated region
    $region30: #{_lambda_.1} parent=1 // pred_check
      _
    $region31: #{_lambda_.1} parent=1 // pred_check_branch
      %100 = sbr.rel (0) target = $region33
    $region32: #{_lambda_.1} parent=1 // pred_region
      _
    $region33: #{_lambda_.1} parent=1 // pred_fallthru
      _
    // Predicated region
    $region34: #{_lambda_.1} parent=1 // pred_check
      _
    $region35: #{_lambda_.1} parent=1 // pred_check_branch
      %102 = sbr.rel (0) target = $region37
    $region36: #{_lambda_.1} parent=1 // pred_region
      _
    $region37: #{_lambda_.1} parent=1 // pred_fallthru
      _
    // Predicated region
    $region38: #{_lambda_.1} parent=1 // pred_check
      _
    $region39: #{_lambda_.1} parent=1 // pred_check_branch
      %104 = sbr.rel (0) target = $region41
    $region40: #{_lambda_.1} parent=1 // pred_region
      _
    $region41: #{_lambda_.1} parent=1 // pred_fallthru
      _
    // Predicated region
    $region42: #{_lambda_.1} parent=1 // pred_check
      _
    $region43: #{_lambda_.1} parent=1 // pred_check_branch
      %106 = sbr.rel (0) target = $region45
    $region44: #{_lambda_.1} parent=1 // pred_region
      _
    $region45: #{_lambda_.1} parent=1 // pred_fallthru
      _
    // Predicated region
    $region46: #{_lambda_.1} parent=1 // pred_check
      _
    $region47: #{_lambda_.1} parent=1 // pred_check_branch
      %108 = sbr.rel (0) target = $region49
    $region48: #{_lambda_.1} parent=1 // pred_region
      _
    $region49: #{_lambda_.1} parent=1 // pred_fallthru
      _
    // Predicated region
    $region50: #{_lambda_.1} parent=1 // pred_check
      _
    $region51: #{_lambda_.1} parent=1 // pred_check_branch
      %110 = sbr.rel (0) target = $region53
    $region52: #{_lambda_.1} parent=1 // pred_region
      _
    $region53: #{_lambda_.1} parent=1 // pred_fallthru
      _
    // Predicated region
    $region54: #{_lambda_.1} parent=1 // pred_check
      _
    $region55: #{_lambda_.1} parent=1 // pred_check_branch
      %112 = sbr.rel (0) target = $region57
    $region56: #{_lambda_.1} parent=1 // pred_region
      _
    $region57: #{_lambda_.1} parent=1 // pred_fallthru
      _
    // Predicated region
    $region58: #{_lambda_.1} parent=1 // pred_check
      _
    $region59: #{_lambda_.1} parent=1 // pred_check_branch
      %114 = sbr.rel (0) target = $region61
    $region60: #{_lambda_.1} parent=1 // pred_region
      _
    $region61: #{_lambda_.1} parent=1 // pred_fallthru
      _
    // Predicated region
    $region62: #{_lambda_.1} parent=1 // pred_check
      _
    $region63: #{_lambda_.1} parent=1 // pred_check_branch
      %116 = sbr.rel (0) target = $region65
    $region64: #{_lambda_.1} parent=1 // pred_region
      _
    $region65: #{_lambda_.1} parent=1 // pred_fallthru
      _
    // Predicated region
    $region66: #{_lambda_.1} parent=1 // pred_check
      _
    $region67: #{_lambda_.1} parent=1 // pred_check_branch
      %118 = sbr.rel (0) target = $region69
    $region68: #{_lambda_.1} parent=1 // pred_region
      _
    $region69: #{_lambda_.1} parent=1 // pred_fallthru
      _
    // Predicated region
    $region70: #{_lambda_.1} parent=1 // pred_check
      _
    $region71: #{_lambda_.1} parent=1 // pred_check_branch
      %120 = sbr.rel (0) target = $region73
    $region72: #{_lambda_.1} parent=1 // pred_region
      _
    $region73: #{_lambda_.1} parent=1 // pred_fallthru
      _
    // Predicated region
    $region74: #{_lambda_.1} parent=1 // pred_check
      _
    $region75: #{_lambda_.1} parent=1 // pred_check_branch
      %122 = sbr.rel (0) target = $region77
    $region76: #{_lambda_.1} parent=1 // pred_region
      _
    $region77: #{_lambda_.1} parent=1 // pred_fallthru
      _
    // Predicated region
    $region78: #{_lambda_.1} parent=1 // pred_check
      _
    $region79: #{_lambda_.1} parent=1 // pred_check_branch
      %124 = sbr.rel (0) target = $region81
    $region80: #{_lambda_.1} parent=1 // pred_region
      _
    $region81: #{_lambda_.1} parent=1 // pred_fallthru
      _
    // Predicated region
    $region82: #{_lambda_.1} parent=1 // pred_check
      _
    $region83: #{_lambda_.1} parent=1 // pred_check_branch
      %126 = sbr.rel (0) target = $region85
    $region84: #{_lambda_.1} parent=1 // pred_region
      _
    $region85: #{_lambda_.1} parent=1 // pred_fallthru
      _
    // Predicated region
    $region86: #{_lambda_.1} parent=1 // pred_check
      _
    $region87: #{_lambda_.1} parent=1 // pred_check_branch
      %128 = sbr.rel (0) target = $region89
    $region88: #{_lambda_.1} parent=1 // pred_region
      _
    $region89: #{_lambda_.1} parent=1 // pred_fallthru
      _
    // Predicated region
    $region90: #{_lambda_.1} parent=1 // pred_check
      _
    $region91: #{_lambda_.1} parent=1 // pred_check_branch
      %130 = sbr.rel (0) target = $region93
    $region92: #{_lambda_.1} parent=1 // pred_region
      _
    $region93: #{_lambda_.1} parent=1 // pred_fallthru
      _
    // Predicated region
    $region94: #{_lambda_.1} parent=1 // pred_check
      _
    $region95: #{_lambda_.1} parent=1 // pred_check_branch
      %132 = sbr.rel (0) target = $region97
    $region96: #{_lambda_.1} parent=1 // pred_region
      _
    $region97: #{_lambda_.1} parent=1 // pred_fallthru
      _
    // Predicated region
    $region98: #{_lambda_.1} parent=1 // pred_check
      _
    $region99: #{_lambda_.1} parent=1 // pred_check_branch
      %134 = sbr.rel (0) target = $region101
    $region100: #{_lambda_.1} parent=1 // pred_region
      _
    $region101: #{_lambda_.1} parent=1 // pred_fallthru
      _
    // Predicated region
    $region102: #{_lambda_.1} parent=1 // pred_check
      _
    $region103: #{_lambda_.1} parent=1 // pred_check_branch
      %136 = sbr.rel (0) target = $region105
    $region104: #{_lambda_.1} parent=1 // pred_region
      _
    $region105: #{_lambda_.1} parent=1 // pred_fallthru
      _
    // Predicated region
    $region106: #{_lambda_.1} parent=1 // pred_check
      _
    $region107: #{_lambda_.1} parent=1 // pred_check_branch
      %138 = sbr.rel (0) target = $region109
    $region108: #{_lambda_.1} parent=1 // pred_region
      _
    $region109: #{_lambda_.1} parent=1 // pred_fallthru
      _
    // Predicated region
    $region110: #{_lambda_.1} parent=1 // pred_check
      _
    $region111: #{_lambda_.1} parent=1 // pred_check_branch
      %140 = sbr.rel (0) target = $region113
    $region112: #{_lambda_.1} parent=1 // pred_region
      _
    $region113: #{_lambda_.1} parent=1 // pred_fallthru
      _
    // Predicated region
    $region114: #{_lambda_.1} parent=1 // pred_check
      _
    $region115: #{_lambda_.1} parent=1 // pred_check_branch
      %142 = sbr.rel (0) target = $region117
    $region116: #{_lambda_.1} parent=1 // pred_region
      _
    $region117: #{_lambda_.1} parent=1 // pred_fallthru
      _
    // Predicated region
    $region118: #{_lambda_.1} parent=1 // pred_check
      _
    $region119: #{_lambda_.1} parent=1 // pred_check_branch
      %144 = sbr.rel (0) target = $region121
    $region120: #{_lambda_.1} parent=1 // pred_region
      %145 = dma.done [#allocation3], 24576
    $region121: #{_lambda_.1} parent=1 // pred_fallthru
      _
    %v146 = vld [vmem:[%s1] sm:$0xff]
    %v147 = vld [vmem:[%s1 + $0x8] sm:$0xff]
    %v148 = vld [vmem:[%s1 + $0x10] sm:$0xff]
    %v149 = vld [vmem:[#allocation2] sm:$0xff]
    %v150 = vld [vmem:[#allocation2 + $0x8] sm:$0xff]
    %v151 = vld [vmem:[#allocation2 + $0x10] sm:$0xff]
    %v152 = vld [vmem:[#allocation2 + $0x18] sm:$0xff]
    %v153 = vld [vmem:[#allocation2 + $0x20] sm:$0xff]
    %v154 = vld [vmem:[#allocation2 + $0x28] sm:$0xff]
    %v155 = vld [vmem:[#allocation2 + $0x30] sm:$0xff]
    %v156 = vld [vmem:[#allocation2 + $0x38] sm:$0xff]
    %v157 = vld [vmem:[#allocation2 + $0x40] sm:$0xff]
    %v158 = vld [vmem:[#allocation2 + $0x48] sm:$0xff]
    %v159 = vld [vmem:[#allocation2 + $0x50] sm:$0xff]
    %v160 = vld [vmem:[#allocation2 + $0x58] sm:$0xff]
    %v161 = vld [vmem:[#allocation2 + $0x60] sm:$0xff]
    %v162 = vld [vmem:[#allocation2 + $0x68] sm:$0xff]
    %v163 = vld [vmem:[#allocation2 + $0x70] sm:$0xff]
    %v164 = vld [vmem:[#allocation2 + $0x78] sm:$0xff]
    %v165 = vld [vmem:[#allocation2 + $0x80] sm:$0xff]
    %v166 = vld [vmem:[#allocation2 + $0x88] sm:$0xff]
    %v167 = vld [vmem:[#allocation2 + $0x90] sm:$0xff]
    %v168 = vld [vmem:[#allocation2 + $0x98] sm:$0xff]
    %v169 = vld [vmem:[#allocation2 + $0xa0] sm:$0xff]
    %v170 = vld [vmem:[#allocation2 + $0xa8] sm:$0xff]
    %v171 = vld [vmem:[#allocation2 + $0xb0] sm:$0xff]
    %v172 = vld [vmem:[#allocation2 + $0xb8] sm:$0xff]
    %v173 = vld [vmem:[#allocation2 + $0xc0] sm:$0xff]
    %v174 = vld [vmem:[#allocation2 + $0xc8] sm:$0xff]
    %v175 = vld [vmem:[#allocation2 + $0xd0] sm:$0xff]
    %v176 = vld [vmem:[#allocation2 + $0xd8] sm:$0xff]
    %v177 = vld [vmem:[#allocation2 + $0xe0] sm:$0xff]
    %v178 = vld [vmem:[#allocation2 + $0xe8] sm:$0xff]
    %v179 = vld [vmem:[#allocation2 + $0xf0] sm:$0xff]
    %v180 = vld [vmem:[#allocation2 + $0xf8] sm:$0xff]
    %v181 = vld [vmem:[#allocation2 + $0x100] sm:$0xff]
    %v182 = vld [vmem:[#allocation2 + $0x108] sm:$0xff]
    %v183 = vld [vmem:[#allocation2 + $0x110] sm:$0xff]
    %v184 = vld [vmem:[#allocation2 + $0x118] sm:$0xff]
    %v185 = vld [vmem:[#allocation2 + $0x120] sm:$0xff]
    %v186 = vld [vmem:[#allocation2 + $0x128] sm:$0xff]
    %v187 = vld [vmem:[#allocation2 + $0x130] sm:$0xff]
    %v188 = vld [vmem:[#allocation2 + $0x138] sm:$0xff]
    %v189 = vld [vmem:[#allocation2 + $0x140] sm:$0xff]
    %v190 = vld [vmem:[#allocation2 + $0x148] sm:$0xff]
    %v191 = vld [vmem:[#allocation2 + $0x150] sm:$0xff]
    %v192 = vld [vmem:[#allocation2 + $0x158] sm:$0xff]
    %v193 = vld [vmem:[#allocation2 + $0x160] sm:$0xff]
    %v194 = vld [vmem:[#allocation2 + $0x168] sm:$0xff]
    %v195 = vld [vmem:[#allocation2 + $0x170] sm:$0xff]
    %v196 = vld [vmem:[#allocation2 + $0x178] sm:$0xff]
    %v197 = vld [vmem:[#allocation2 + $0x180] sm:$0xff]
    %v198 = vld [vmem:[#allocation2 + $0x188] sm:$0xff]
    %v199 = vld [vmem:[#allocation2 + $0x190] sm:$0xff]
    %v200 = vld [vmem:[#allocation2 + $0x198] sm:$0xff]
    %v201 = vld [vmem:[#allocation2 + $0x1a0] sm:$0xff]
    %v202 = vld [vmem:[#allocation2 + $0x1a8] sm:$0xff]
    %v203 = vld [vmem:[#allocation2 + $0x1b0] sm:$0xff]
    %v204 = vld [vmem:[#allocation2 + $0x1b8] sm:$0xff]
    %v205 = vld [vmem:[#allocation2 + $0x1c0] sm:$0xff]
    %v206 = vld [vmem:[#allocation2 + $0x1c8] sm:$0xff]
    %v207 = vld [vmem:[#allocation2 + $0x1d0] sm:$0xff]
    %v208 = vld [vmem:[#allocation2 + $0x1d8] sm:$0xff]
    %v209 = vld [vmem:[#allocation2 + $0x1e0] sm:$0xff]
    %v210 = vld [vmem:[#allocation2 + $0x1e8] sm:$0xff]
    %v211 = vld [vmem:[#allocation2 + $0x1f0] sm:$0xff]
    %v212 = vld [vmem:[#allocation2 + $0x1f8] sm:$0xff]
    %v213 = vld [vmem:[#allocation2 + $0x200] sm:$0xff]
    %v214 = vld [vmem:[#allocation2 + $0x208] sm:$0xff]
    %v215 = vld [vmem:[#allocation2 + $0x210] sm:$0xff]
    %v216 = vld [vmem:[#allocation2 + $0x218] sm:$0xff]
    %v217 = vld [vmem:[#allocation2 + $0x220] sm:$0xff]
    %v218 = vld [vmem:[#allocation2 + $0x228] sm:$0xff]
    %v219 = vld [vmem:[#allocation2 + $0x230] sm:$0xff]
    %v220 = vld [vmem:[#allocation2 + $0x238] sm:$0xff]
    %v221 = vld [vmem:[#allocation2 + $0x240] sm:$0xff]
    %v222 = vld [vmem:[#allocation2 + $0x248] sm:$0xff]
    %v223 = vld [vmem:[#allocation2 + $0x250] sm:$0xff]
    %v224 = vld [vmem:[#allocation2 + $0x258] sm:$0xff]
    %v225 = vld [vmem:[#allocation2 + $0x260] sm:$0xff]
    %v226 = vld [vmem:[#allocation2 + $0x268] sm:$0xff]
    %v227 = vld [vmem:[#allocation2 + $0x270] sm:$0xff]
    %v228 = vld [vmem:[#allocation2 + $0x278] sm:$0xff]
    %v229 = vld [vmem:[#allocation2 + $0x280] sm:$0xff]
    %v230 = vld [vmem:[#allocation2 + $0x288] sm:$0xff]
    %v231 = vld [vmem:[#allocation2 + $0x290] sm:$0xff]
    %v232 = vld [vmem:[#allocation2 + $0x298] sm:$0xff]
    %v233 = vld [vmem:[#allocation2 + $0x2a0] sm:$0xff]
    %v234 = vld [vmem:[#allocation2 + $0x2a8] sm:$0xff]
    %v235 = vld [vmem:[#allocation2 + $0x2b0] sm:$0xff]
    %v236 = vld [vmem:[#allocation2 + $0x2b8] sm:$0xff]
    %v237 = vld [vmem:[#allocation2 + $0x2c0] sm:$0xff]
    %v238 = vld [vmem:[#allocation2 + $0x2c8] sm:$0xff]
    %v239 = vld [vmem:[#allocation2 + $0x2d0] sm:$0xff]
    %v240 = vld [vmem:[#allocation2 + $0x2d8] sm:$0xff]
    %v241 = vld [vmem:[#allocation2 + $0x2e0] sm:$0xff]
    %v242 = vld [vmem:[#allocation2 + $0x2e8] sm:$0xff]
    %v243 = vld [vmem:[#allocation2 + $0x2f0] sm:$0xff]
    %v244 = vld [vmem:[#allocation2 + $0x2f8] sm:$0xff]
    %v245 = vld [vmem:[#allocation2 + $0x300] sm:$0xff]
    %v246 = vld [vmem:[#allocation2 + $0x308] sm:$0xff]
    %v247 = vld [vmem:[#allocation2 + $0x310] sm:$0xff]
    %v248 = vld [vmem:[#allocation2 + $0x318] sm:$0xff]
    %v249 = vld [vmem:[#allocation2 + $0x320] sm:$0xff]
    %v250 = vld [vmem:[#allocation2 + $0x328] sm:$0xff]
    %v251 = vld [vmem:[#allocation2 + $0x330] sm:$0xff]
    %v252 = vld [vmem:[#allocation2 + $0x338] sm:$0xff]
    %v253 = vld [vmem:[#allocation2 + $0x340] sm:$0xff]
    %v254 = vld [vmem:[#allocation2 + $0x348] sm:$0xff]
    %v255 = vld [vmem:[#allocation2 + $0x350] sm:$0xff]
    %v256 = vld [vmem:[#allocation2 + $0x358] sm:$0xff]
    %v257 = vld [vmem:[#allocation2 + $0x360] sm:$0xff]
    %v258 = vld [vmem:[#allocation2 + $0x368] sm:$0xff]
    %v259 = vld [vmem:[#allocation2 + $0x370] sm:$0xff]
    %v260 = vld [vmem:[#allocation2 + $0x378] sm:$0xff]
    %v261 = vld [vmem:[#allocation2 + $0x380] sm:$0xff]
    %v262 = vld [vmem:[#allocation2 + $0x388] sm:$0xff]
    %v263 = vld [vmem:[#allocation2 + $0x390] sm:$0xff]
    %v264 = vld [vmem:[#allocation2 + $0x398] sm:$0xff]
    %v265 = vld [vmem:[#allocation2 + $0x3a0] sm:$0xff]
    %v266 = vld [vmem:[#allocation2 + $0x3a8] sm:$0xff]
    %v267 = vld [vmem:[#allocation2 + $0x3b0] sm:$0xff]
    %v268 = vld [vmem:[#allocation2 + $0x3b8] sm:$0xff]
    %v269 = vld [vmem:[#allocation2 + $0x3c0] sm:$0xff]
    %v270 = vld [vmem:[#allocation2 + $0x3c8] sm:$0xff]
    %v271 = vld [vmem:[#allocation2 + $0x3d0] sm:$0xff]
    %v272 = vld [vmem:[#allocation2 + $0x3d8] sm:$0xff]
    %v273 = vld [vmem:[#allocation2 + $0x3e0] sm:$0xff]
    %v274 = vld [vmem:[#allocation2 + $0x3e8] sm:$0xff]
    %v275 = vld [vmem:[#allocation2 + $0x3f0] sm:$0xff]
    %v276 = vld [vmem:[#allocation2 + $0x3f8] sm:$0xff]
    %v277 = vld [vmem:[#allocation2 + $0x400] sm:$0xff]
    %v278 = vld [vmem:[#allocation2 + $0x408] sm:$0xff]
    %v279 = vld [vmem:[#allocation2 + $0x410] sm:$0xff]
    %v280 = vld [vmem:[#allocation2 + $0x418] sm:$0xff]
    %v281 = vld [vmem:[#allocation2 + $0x420] sm:$0xff]
    %v282 = vld [vmem:[#allocation2 + $0x428] sm:$0xff]
    %v283 = vld [vmem:[#allocation2 + $0x430] sm:$0xff]
    %v284 = vld [vmem:[#allocation2 + $0x438] sm:$0xff]
    %v285 = vld [vmem:[#allocation2 + $0x440] sm:$0xff]
    %v286 = vld [vmem:[#allocation2 + $0x448] sm:$0xff]
    %v287 = vld [vmem:[#allocation2 + $0x450] sm:$0xff]
    %v288 = vld [vmem:[#allocation2 + $0x458] sm:$0xff]
    %v289 = vld [vmem:[#allocation2 + $0x460] sm:$0xff]
    %v290 = vld [vmem:[#allocation2 + $0x468] sm:$0xff]
    %v291 = vld [vmem:[#allocation2 + $0x470] sm:$0xff]
    %v292 = vld [vmem:[#allocation2 + $0x478] sm:$0xff]
    %v293 = vld [vmem:[#allocation2 + $0x480] sm:$0xff]
    %v294 = vld [vmem:[#allocation2 + $0x488] sm:$0xff]
    %v295 = vld [vmem:[#allocation2 + $0x490] sm:$0xff]
    %v296 = vld [vmem:[#allocation2 + $0x498] sm:$0xff]
    %v297 = vld [vmem:[#allocation2 + $0x4a0] sm:$0xff]
    %v298 = vld [vmem:[#allocation2 + $0x4a8] sm:$0xff]
    %v299 = vld [vmem:[#allocation2 + $0x4b0] sm:$0xff]
    %v300 = vld [vmem:[#allocation2 + $0x4b8] sm:$0xff]
    %v301 = vld [vmem:[#allocation2 + $0x4c0] sm:$0xff]
    %v302 = vld [vmem:[#allocation2 + $0x4c8] sm:$0xff]
    %v303 = vld [vmem:[#allocation2 + $0x4d0] sm:$0xff]
    %v304 = vld [vmem:[#allocation2 + $0x4d8] sm:$0xff]
    %v305 = vld [vmem:[#allocation2 + $0x4e0] sm:$0xff]
    %v306 = vld [vmem:[#allocation2 + $0x4e8] sm:$0xff]
    %v307 = vld [vmem:[#allocation2 + $0x4f0] sm:$0xff]
    %v308 = vld [vmem:[#allocation2 + $0x4f8] sm:$0xff]
    %v309 = vld [vmem:[#allocation2 + $0x500] sm:$0xff]
    %v310 = vld [vmem:[#allocation2 + $0x508] sm:$0xff]
    %v311 = vld [vmem:[#allocation2 + $0x510] sm:$0xff]
    %v312 = vld [vmem:[#allocation2 + $0x518] sm:$0xff]
    %v313 = vld [vmem:[#allocation2 + $0x520] sm:$0xff]
    %v314 = vld [vmem:[#allocation2 + $0x528] sm:$0xff]
    %v315 = vld [vmem:[#allocation2 + $0x530] sm:$0xff]
    %v316 = vld [vmem:[#allocation2 + $0x538] sm:$0xff]
    %v317 = vld [vmem:[#allocation2 + $0x540] sm:$0xff]
    %v318 = vld [vmem:[#allocation2 + $0x548] sm:$0xff]
    %v319 = vld [vmem:[#allocation2 + $0x550] sm:$0xff]
    %v320 = vld [vmem:[#allocation2 + $0x558] sm:$0xff]
    %v321 = vld [vmem:[#allocation2 + $0x560] sm:$0xff]
    %v322 = vld [vmem:[#allocation2 + $0x568] sm:$0xff]
    %v323 = vld [vmem:[#allocation2 + $0x570] sm:$0xff]
    %v324 = vld [vmem:[#allocation2 + $0x578] sm:$0xff]
    %v325 = vld [vmem:[#allocation2 + $0x580] sm:$0xff]
    %v326 = vld [vmem:[#allocation2 + $0x588] sm:$0xff]
    %v327 = vld [vmem:[#allocation2 + $0x590] sm:$0xff]
    %v328 = vld [vmem:[#allocation2 + $0x598] sm:$0xff]
    %v329 = vld [vmem:[#allocation2 + $0x5a0] sm:$0xff]
    %v330 = vld [vmem:[#allocation2 + $0x5a8] sm:$0xff]
    %v331 = vld [vmem:[#allocation2 + $0x5b0] sm:$0xff]
    %v332 = vld [vmem:[#allocation2 + $0x5b8] sm:$0xff]
    %v333 = vld [vmem:[#allocation2 + $0x5c0] sm:$0xff]
    %v334 = vld [vmem:[#allocation2 + $0x5c8] sm:$0xff]
    %v335 = vld [vmem:[#allocation2 + $0x5d0] sm:$0xff]
    %v336 = vld [vmem:[#allocation2 + $0x5d8] sm:$0xff]
    %v337 = vld [vmem:[#allocation2 + $0x5e0] sm:$0xff]
    %v338 = vld [vmem:[#allocation2 + $0x5e8] sm:$0xff]
    %v339 = vld [vmem:[#allocation2 + $0x5f0] sm:$0xff]
    %v340 = vld [vmem:[#allocation2 + $0x5f8] sm:$0xff]
    %v341 = vld [vmem:[%s9] sm:$0x1]
    %v343 = vlaneseq
    %v344 = vshrl.u32 %v343, 7
    %v345 = vsub.s32 0, %v344
    %v346 = vrot.slane %v341, %v345
    %v351 = vcombine.high %v146, %v146
    %v353 = vunpack.c.l.s4 1983009808
    %v354 = vunpack.c.0.s8 %v353
    %v355 = vlaneseq
    %v356 = vshrl.u32 %v355, 7
    %v357 = vsub.s32 %v354, %v356
    %v358 = vrot.slane %v146, %v357
    %v360 = vunpack.c.l.s4 1983009808
    %v361 = vunpack.c.0.s8 %v360
    %v362 = vlaneseq
    %v363 = vshrl.u32 %v362, 7
    %v364 = vsub.s32 %v361, %v363
    %v365 = vrot.slane %v351, %v364
    %v366 = vcombine.high %v358, %v358
    %v367 = vcombine.high %v365, %v365
    %v368 = vcombine.high %v147, %v147
    %v370 = vunpack.c.l.s4 1983009808
    %v371 = vunpack.c.0.s8 %v370
    %v372 = vlaneseq
    %v373 = vshrl.u32 %v372, 7
    %v374 = vsub.s32 %v371, %v373
    %v375 = vrot.slane %v147, %v374
    %v377 = vunpack.c.l.s4 1983009808
    %v378 = vunpack.c.0.s8 %v377
    %v379 = vlaneseq
    %v380 = vshrl.u32 %v379, 7
    %v381 = vsub.s32 %v378, %v380
    %v382 = vrot.slane %v368, %v381
    %v383 = vcombine.high %v375, %v375
    %v384 = vcombine.high %v382, %v382
    %v385 = vcombine.high %v148, %v148
    %v387 = vunpack.c.l.s4 1983009808
    %v388 = vunpack.c.0.s8 %v387
    %v389 = vlaneseq
    %v390 = vshrl.u32 %v389, 7
    %v391 = vsub.s32 %v388, %v390
    %v392 = vrot.slane %v148, %v391
    %v394 = vunpack.c.l.s4 1983009808
    %v395 = vunpack.c.0.s8 %v394
    %v396 = vlaneseq
    %v397 = vshrl.u32 %v396, 7
    %v398 = vsub.s32 %v395, %v397
    %v399 = vrot.slane %v385, %v398
    %v400 = vcombine.high %v392, %v392
    %v401 = vcombine.high %v399, %v399
    %414 = vmatprep.subr.mxu0 0.0
    %415 = vmatpush1.msra.mxu0 %v164
    %416 = vmatprep.subr.mxu0 0.0
    %417 = vmatpush1.msra.mxu0 %v163
    %418 = vmatprep.subr.mxu0 0.0
    %419 = vmatpush1.msra.mxu0 %v162
    %420 = vmatprep.subr.mxu0 0.0
    %421 = vmatpush1.msra.mxu0 %v161
    %422 = vmatprep.subr.mxu0 0.0
    %423 = vmatpush1.msra.mxu0 %v160
    %424 = vmatprep.subr.mxu0 0.0
    %425 = vmatpush1.msra.mxu0 %v159
    %426 = vmatprep.subr.mxu0 0.0
    %427 = vmatpush1.msra.mxu0 %v158
    %428 = vmatprep.subr.mxu0 0.0
    %429 = vmatpush1.msra.mxu0 %v157
    %430 = vmatprep.subr.mxu0 0.0
    %431 = vmatpush1.msra.mxu0 %v156
    %432 = vmatprep.subr.mxu0 0.0
    %433 = vmatpush1.msra.mxu0 %v155
    %434 = vmatprep.subr.mxu0 0.0
    %435 = vmatpush1.msra.mxu0 %v154
    %436 = vmatprep.subr.mxu0 0.0
    %437 = vmatpush1.msra.mxu0 %v153
    %438 = vmatprep.subr.mxu0 0.0
    %439 = vmatpush1.msra.mxu0 %v152
    %440 = vmatprep.subr.mxu0 0.0
    %441 = vmatpush1.msra.mxu0 %v151
    %442 = vmatprep.subr.mxu0 0.0
    %443 = vmatpush1.msra.mxu0 %v150
    %444 = vmatprep.subr.mxu0 0.0
    %445 = vmatpush1.msra.mxu0 %v149
    %446 = vmatprep.subr.mxu0 0.0
    %447 = vmatpush2.msra.mxu0 %v180
    %448 = vmatprep.subr.mxu0 0.0
    %449 = vmatpush2.msra.mxu0 %v179
    %450 = vmatprep.subr.mxu0 0.0
    %451 = vmatpush2.msra.mxu0 %v178
    %452 = vmatprep.subr.mxu0 0.0
    %453 = vmatpush2.msra.mxu0 %v177
    %454 = vmatprep.subr.mxu0 0.0
    %455 = vmatpush2.msra.mxu0 %v176
    %456 = vmatprep.subr.mxu0 0.0
    %457 = vmatpush2.msra.mxu0 %v175
    %458 = vmatprep.subr.mxu0 0.0
    %459 = vmatpush2.msra.mxu0 %v174
    %460 = vmatprep.subr.mxu0 0.0
    %461 = vmatpush2.msra.mxu0 %v173
    %462 = vmatprep.subr.mxu0 0.0
    %463 = vmatpush2.msra.mxu0 %v172
    %464 = vmatprep.subr.mxu0 0.0
    %465 = vmatpush2.msra.mxu0 %v171
    %466 = vmatprep.subr.mxu0 0.0
    %467 = vmatpush2.msra.mxu0 %v170
    %468 = vmatprep.subr.mxu0 0.0
    %469 = vmatpush2.msra.mxu0 %v169
    %470 = vmatprep.subr.mxu0 0.0
    %471 = vmatpush2.msra.mxu0 %v168
    %472 = vmatprep.subr.mxu0 0.0
    %473 = vmatpush2.msra.mxu0 %v167
    %474 = vmatprep.subr.mxu0 0.0
    %475 = vmatpush2.msra.mxu0 %v166
    %476 = vmatprep.subr.mxu0 0.0
    %477 = vmatpush2.msra.mxu0 %v165
    %478 = vmatprep.mubr.f32.mxu0 %v366
    %479 = vmatmul.mubr.f32.gmra.mxu0 %v358
    %v480 = vpop.f32.mrf.mxu0
    %v481 = vadd.f32 %v346, %v480
    %v482 = vpop.f32.mrf.mxu0
    %483 = vdwg.mxu0
    %484 = vmatprep.subr.mxu0 0.0
    %485 = vmatpush1.msra.mxu0 %v196
    %486 = vmatprep.subr.mxu0 0.0
    %487 = vmatpush1.msra.mxu0 %v195
    %488 = vmatprep.subr.mxu0 0.0
    %489 = vmatpush1.msra.mxu0 %v194
    %490 = vmatprep.subr.mxu0 0.0
    %491 = vmatpush1.msra.mxu0 %v193
    %492 = vmatprep.subr.mxu0 0.0
    %493 = vmatpush1.msra.mxu0 %v192
    %494 = vmatprep.subr.mxu0 0.0
    %495 = vmatpush1.msra.mxu0 %v191
    %496 = vmatprep.subr.mxu0 0.0
    %497 = vmatpush1.msra.mxu0 %v190
    %498 = vmatprep.subr.mxu0 0.0
    %499 = vmatpush1.msra.mxu0 %v189
    %500 = vmatprep.subr.mxu0 0.0
    %501 = vmatpush1.msra.mxu0 %v188
    %502 = vmatprep.subr.mxu0 0.0
    %503 = vmatpush1.msra.mxu0 %v187
    %504 = vmatprep.subr.mxu0 0.0
    %505 = vmatpush1.msra.mxu0 %v186
    %506 = vmatprep.subr.mxu0 0.0
    %507 = vmatpush1.msra.mxu0 %v185
    %508 = vmatprep.subr.mxu0 0.0
    %509 = vmatpush1.msra.mxu0 %v184
    %510 = vmatprep.subr.mxu0 0.0
    %511 = vmatpush1.msra.mxu0 %v183
    %512 = vmatprep.subr.mxu0 0.0
    %513 = vmatpush1.msra.mxu0 %v182
    %514 = vmatprep.subr.mxu0 0.0
    %515 = vmatpush1.msra.mxu0 %v181
    %516 = vmatprep.subr.mxu0 0.0
    %517 = vmatpush2.msra.mxu0 %v212
    %518 = vmatprep.subr.mxu0 0.0
    %519 = vmatpush2.msra.mxu0 %v211
    %520 = vmatprep.subr.mxu0 0.0
    %521 = vmatpush2.msra.mxu0 %v210
    %522 = vmatprep.subr.mxu0 0.0
    %523 = vmatpush2.msra.mxu0 %v209
    %524 = vmatprep.subr.mxu0 0.0
    %525 = vmatpush2.msra.mxu0 %v208
    %526 = vmatprep.subr.mxu0 0.0
    %527 = vmatpush2.msra.mxu0 %v207
    %528 = vmatprep.subr.mxu0 0.0
    %529 = vmatpush2.msra.mxu0 %v206
    %530 = vmatprep.subr.mxu0 0.0
    %531 = vmatpush2.msra.mxu0 %v205
    %532 = vmatprep.subr.mxu0 0.0
    %533 = vmatpush2.msra.mxu0 %v204
    %534 = vmatprep.subr.mxu0 0.0
    %535 = vmatpush2.msra.mxu0 %v203
    %536 = vmatprep.subr.mxu0 0.0
    %537 = vmatpush2.msra.mxu0 %v202
    %538 = vmatprep.subr.mxu0 0.0
    %539 = vmatpush2.msra.mxu0 %v201
    %540 = vmatprep.subr.mxu0 0.0
    %541 = vmatpush2.msra.mxu0 %v200
    %542 = vmatprep.subr.mxu0 0.0
    %543 = vmatpush2.msra.mxu0 %v199
    %544 = vmatprep.subr.mxu0 0.0
    %545 = vmatpush2.msra.mxu0 %v198
    %546 = vmatprep.subr.mxu0 0.0
    %547 = vmatpush2.msra.mxu0 %v197
    %548 = vmatprep.mubr.f32.mxu0 %v367
    %549 = vmatmul.mubr.f32.gmra.mxu0 %v365
    %v550 = vpop.f32.mrf.mxu0
    %v551 = vadd.f32 %v481, %v550
    %v552 = vpop.f32.mrf.mxu0
    %553 = vdwg.mxu0
    %554 = vmatprep.subr.mxu0 0.0
    %555 = vmatpush1.msra.mxu0 %v228
    %556 = vmatprep.subr.mxu0 0.0
    %557 = vmatpush1.msra.mxu0 %v227
    %558 = vmatprep.subr.mxu0 0.0
    %559 = vmatpush1.msra.mxu0 %v226
    %560 = vmatprep.subr.mxu0 0.0
    %561 = vmatpush1.msra.mxu0 %v225
    %562 = vmatprep.subr.mxu0 0.0
    %563 = vmatpush1.msra.mxu0 %v224
    %564 = vmatprep.subr.mxu0 0.0
    %565 = vmatpush1.msra.mxu0 %v223
    %566 = vmatprep.subr.mxu0 0.0
    %567 = vmatpush1.msra.mxu0 %v222
    %568 = vmatprep.subr.mxu0 0.0
    %569 = vmatpush1.msra.mxu0 %v221
    %570 = vmatprep.subr.mxu0 0.0
    %571 = vmatpush1.msra.mxu0 %v220
    %572 = vmatprep.subr.mxu0 0.0
    %573 = vmatpush1.msra.mxu0 %v219
    %574 = vmatprep.subr.mxu0 0.0
    %575 = vmatpush1.msra.mxu0 %v218
    %576 = vmatprep.subr.mxu0 0.0
    %577 = vmatpush1.msra.mxu0 %v217
    %578 = vmatprep.subr.mxu0 0.0
    %579 = vmatpush1.msra.mxu0 %v216
    %580 = vmatprep.subr.mxu0 0.0
    %581 = vmatpush1.msra.mxu0 %v215
    %582 = vmatprep.subr.mxu0 0.0
    %583 = vmatpush1.msra.mxu0 %v214
    %584 = vmatprep.subr.mxu0 0.0
    %585 = vmatpush1.msra.mxu0 %v213
    %586 = vmatprep.subr.mxu0 0.0
    %587 = vmatpush2.msra.mxu0 %v244
    %588 = vmatprep.subr.mxu0 0.0
    %589 = vmatpush2.msra.mxu0 %v243
    %590 = vmatprep.subr.mxu0 0.0
    %591 = vmatpush2.msra.mxu0 %v242
    %592 = vmatprep.subr.mxu0 0.0
    %593 = vmatpush2.msra.mxu0 %v241
    %594 = vmatprep.subr.mxu0 0.0
    %595 = vmatpush2.msra.mxu0 %v240
    %596 = vmatprep.subr.mxu0 0.0
    %597 = vmatpush2.msra.mxu0 %v239
    %598 = vmatprep.subr.mxu0 0.0
    %599 = vmatpush2.msra.mxu0 %v238
    %600 = vmatprep.subr.mxu0 0.0
    %601 = vmatpush2.msra.mxu0 %v237
    %602 = vmatprep.subr.mxu0 0.0
    %603 = vmatpush2.msra.mxu0 %v236
    %604 = vmatprep.subr.mxu0 0.0
    %605 = vmatpush2.msra.mxu0 %v235
    %606 = vmatprep.subr.mxu0 0.0
    %607 = vmatpush2.msra.mxu0 %v234
    %608 = vmatprep.subr.mxu0 0.0
    %609 = vmatpush2.msra.mxu0 %v233
    %610 = vmatprep.subr.mxu0 0.0
    %611 = vmatpush2.msra.mxu0 %v232
    %612 = vmatprep.subr.mxu0 0.0
    %613 = vmatpush2.msra.mxu0 %v231
    %614 = vmatprep.subr.mxu0 0.0
    %615 = vmatpush2.msra.mxu0 %v230
    %616 = vmatprep.subr.mxu0 0.0
    %617 = vmatpush2.msra.mxu0 %v229
    %618 = vmatprep.mubr.f32.mxu0 %v383
    %619 = vmatmul.mubr.f32.gmra.mxu0 %v375
    %v620 = vpop.f32.mrf.mxu0
    %v621 = vadd.f32 %v551, %v620
    %v622 = vpop.f32.mrf.mxu0
    %623 = vdwg.mxu0
    %624 = vmatprep.subr.mxu0 0.0
    %625 = vmatpush1.msra.mxu0 %v260
    %626 = vmatprep.subr.mxu0 0.0
    %627 = vmatpush1.msra.mxu0 %v259
    %628 = vmatprep.subr.mxu0 0.0
    %629 = vmatpush1.msra.mxu0 %v258
    %630 = vmatprep.subr.mxu0 0.0
    %631 = vmatpush1.msra.mxu0 %v257
    %632 = vmatprep.subr.mxu0 0.0
    %633 = vmatpush1.msra.mxu0 %v256
    %634 = vmatprep.subr.mxu0 0.0
    %635 = vmatpush1.msra.mxu0 %v255
    %636 = vmatprep.subr.mxu0 0.0
    %637 = vmatpush1.msra.mxu0 %v254
    %638 = vmatprep.subr.mxu0 0.0
    %639 = vmatpush1.msra.mxu0 %v253
    %640 = vmatprep.subr.mxu0 0.0
    %641 = vmatpush1.msra.mxu0 %v252
    %642 = vmatprep.subr.mxu0 0.0
    %643 = vmatpush1.msra.mxu0 %v251
    %644 = vmatprep.subr.mxu0 0.0
    %645 = vmatpush1.msra.mxu0 %v250
    %646 = vmatprep.subr.mxu0 0.0
    %647 = vmatpush1.msra.mxu0 %v249
    %648 = vmatprep.subr.mxu0 0.0
    %649 = vmatpush1.msra.mxu0 %v248
    %650 = vmatprep.subr.mxu0 0.0
    %651 = vmatpush1.msra.mxu0 %v247
    %652 = vmatprep.subr.mxu0 0.0
    %653 = vmatpush1.msra.mxu0 %v246
    %654 = vmatprep.subr.mxu0 0.0
    %655 = vmatpush1.msra.mxu0 %v245
    %656 = vmatprep.subr.mxu0 0.0
    %657 = vmatpush2.msra.mxu0 %v276
    %658 = vmatprep.subr.mxu0 0.0
    %659 = vmatpush2.msra.mxu0 %v275
    %660 = vmatprep.subr.mxu0 0.0
    %661 = vmatpush2.msra.mxu0 %v274
    %662 = vmatprep.subr.mxu0 0.0
    %663 = vmatpush2.msra.mxu0 %v273
    %664 = vmatprep.subr.mxu0 0.0
    %665 = vmatpush2.msra.mxu0 %v272
    %666 = vmatprep.subr.mxu0 0.0
    %667 = vmatpush2.msra.mxu0 %v271
    %668 = vmatprep.subr.mxu0 0.0
    %669 = vmatpush2.msra.mxu0 %v270
    %670 = vmatprep.subr.mxu0 0.0
    %671 = vmatpush2.msra.mxu0 %v269
    %672 = vmatprep.subr.mxu0 0.0
    %673 = vmatpush2.msra.mxu0 %v268
    %674 = vmatprep.subr.mxu0 0.0
    %675 = vmatpush2.msra.mxu0 %v267
    %676 = vmatprep.subr.mxu0 0.0
    %677 = vmatpush2.msra.mxu0 %v266
    %678 = vmatprep.subr.mxu0 0.0
    %679 = vmatpush2.msra.mxu0 %v265
    %680 = vmatprep.subr.mxu0 0.0
    %681 = vmatpush2.msra.mxu0 %v264
    %682 = vmatprep.subr.mxu0 0.0
    %683 = vmatpush2.msra.mxu0 %v263
    %684 = vmatprep.subr.mxu0 0.0
    %685 = vmatpush2.msra.mxu0 %v262
    %686 = vmatprep.subr.mxu0 0.0
    %687 = vmatpush2.msra.mxu0 %v261
    %688 = vmatprep.mubr.f32.mxu0 %v384
    %689 = vmatmul.mubr.f32.gmra.mxu0 %v382
    %v690 = vpop.f32.mrf.mxu0
    %v691 = vadd.f32 %v621, %v690
    %v692 = vpop.f32.mrf.mxu0
    %693 = vdwg.mxu0
    %694 = vmatprep.subr.mxu0 0.0
    %695 = vmatpush1.msra.mxu0 %v292
    %696 = vmatprep.subr.mxu0 0.0
    %697 = vmatpush1.msra.mxu0 %v291
    %698 = vmatprep.subr.mxu0 0.0
    %699 = vmatpush1.msra.mxu0 %v290
    %700 = vmatprep.subr.mxu0 0.0
    %701 = vmatpush1.msra.mxu0 %v289
    %702 = vmatprep.subr.mxu0 0.0
    %703 = vmatpush1.msra.mxu0 %v288
    %704 = vmatprep.subr.mxu0 0.0
    %705 = vmatpush1.msra.mxu0 %v287
    %706 = vmatprep.subr.mxu0 0.0
    %707 = vmatpush1.msra.mxu0 %v286
    %708 = vmatprep.subr.mxu0 0.0
    %709 = vmatpush1.msra.mxu0 %v285
    %710 = vmatprep.subr.mxu0 0.0
    %711 = vmatpush1.msra.mxu0 %v284
    %712 = vmatprep.subr.mxu0 0.0
    %713 = vmatpush1.msra.mxu0 %v283
    %714 = vmatprep.subr.mxu0 0.0
    %715 = vmatpush1.msra.mxu0 %v282
    %716 = vmatprep.subr.mxu0 0.0
    %717 = vmatpush1.msra.mxu0 %v281
    %718 = vmatprep.subr.mxu0 0.0
    %719 = vmatpush1.msra.mxu0 %v280
    %720 = vmatprep.subr.mxu0 0.0
    %721 = vmatpush1.msra.mxu0 %v279
    %722 = vmatprep.subr.mxu0 0.0
    %723 = vmatpush1.msra.mxu0 %v278
    %724 = vmatprep.subr.mxu0 0.0
    %725 = vmatpush1.msra.mxu0 %v277
    %726 = vmatprep.subr.mxu0 0.0
    %727 = vmatpush2.msra.mxu0 %v308
    %728 = vmatprep.subr.mxu0 0.0
    %729 = vmatpush2.msra.mxu0 %v307
    %730 = vmatprep.subr.mxu0 0.0
    %731 = vmatpush2.msra.mxu0 %v306
    %732 = vmatprep.subr.mxu0 0.0
    %733 = vmatpush2.msra.mxu0 %v305
    %734 = vmatprep.subr.mxu0 0.0
    %735 = vmatpush2.msra.mxu0 %v304
    %736 = vmatprep.subr.mxu0 0.0
    %737 = vmatpush2.msra.mxu0 %v303
    %738 = vmatprep.subr.mxu0 0.0
    %739 = vmatpush2.msra.mxu0 %v302
    %740 = vmatprep.subr.mxu0 0.0
    %741 = vmatpush2.msra.mxu0 %v301
    %742 = vmatprep.subr.mxu0 0.0
    %743 = vmatpush2.msra.mxu0 %v300
    %744 = vmatprep.subr.mxu0 0.0
    %745 = vmatpush2.msra.mxu0 %v299
    %746 = vmatprep.subr.mxu0 0.0
    %747 = vmatpush2.msra.mxu0 %v298
    %748 = vmatprep.subr.mxu0 0.0
    %749 = vmatpush2.msra.mxu0 %v297
    %750 = vmatprep.subr.mxu0 0.0
    %751 = vmatpush2.msra.mxu0 %v296
    %752 = vmatprep.subr.mxu0 0.0
    %753 = vmatpush2.msra.mxu0 %v295
    %754 = vmatprep.subr.mxu0 0.0
    %755 = vmatpush2.msra.mxu0 %v294
    %756 = vmatprep.subr.mxu0 0.0
    %757 = vmatpush2.msra.mxu0 %v293
    %758 = vmatprep.mubr.f32.mxu0 %v400
    %759 = vmatmul.mubr.f32.gmra.mxu0 %v392
    %v760 = vpop.f32.mrf.mxu0
    %v761 = vadd.f32 %v691, %v760
    %v762 = vpop.f32.mrf.mxu0
    %763 = vdwg.mxu0
    %764 = vmatprep.subr.mxu0 0.0
    %765 = vmatpush1.msra.mxu0 %v324
    %766 = vmatprep.subr.mxu0 0.0
    %767 = vmatpush1.msra.mxu0 %v323
    %768 = vmatprep.subr.mxu0 0.0
    %769 = vmatpush1.msra.mxu0 %v322
    %770 = vmatprep.subr.mxu0 0.0
    %771 = vmatpush1.msra.mxu0 %v321
    %772 = vmatprep.subr.mxu0 0.0
    %773 = vmatpush1.msra.mxu0 %v320
    %774 = vmatprep.subr.mxu0 0.0
    %775 = vmatpush1.msra.mxu0 %v319
    %776 = vmatprep.subr.mxu0 0.0
    %777 = vmatpush1.msra.mxu0 %v318
    %778 = vmatprep.subr.mxu0 0.0
    %779 = vmatpush1.msra.mxu0 %v317
    %780 = vmatprep.subr.mxu0 0.0
    %781 = vmatpush1.msra.mxu0 %v316
    %782 = vmatprep.subr.mxu0 0.0
    %783 = vmatpush1.msra.mxu0 %v315
    %784 = vmatprep.subr.mxu0 0.0
    %785 = vmatpush1.msra.mxu0 %v314
    %786 = vmatprep.subr.mxu0 0.0
    %787 = vmatpush1.msra.mxu0 %v313
    %788 = vmatprep.subr.mxu0 0.0
    %789 = vmatpush1.msra.mxu0 %v312
    %790 = vmatprep.subr.mxu0 0.0
    %791 = vmatpush1.msra.mxu0 %v311
    %792 = vmatprep.subr.mxu0 0.0
    %793 = vmatpush1.msra.mxu0 %v310
    %794 = vmatprep.subr.mxu0 0.0
    %795 = vmatpush1.msra.mxu0 %v309
    %796 = vmatprep.subr.mxu0 0.0
    %797 = vmatpush2.msra.mxu0 %v340
    %798 = vmatprep.subr.mxu0 0.0
    %799 = vmatpush2.msra.mxu0 %v339
    %800 = vmatprep.subr.mxu0 0.0
    %801 = vmatpush2.msra.mxu0 %v338
    %802 = vmatprep.subr.mxu0 0.0
    %803 = vmatpush2.msra.mxu0 %v337
    %804 = vmatprep.subr.mxu0 0.0
    %805 = vmatpush2.msra.mxu0 %v336
    %806 = vmatprep.subr.mxu0 0.0
    %807 = vmatpush2.msra.mxu0 %v335
    %808 = vmatprep.subr.mxu0 0.0
    %809 = vmatpush2.msra.mxu0 %v334
    %810 = vmatprep.subr.mxu0 0.0
    %811 = vmatpush2.msra.mxu0 %v333
    %812 = vmatprep.subr.mxu0 0.0
    %813 = vmatpush2.msra.mxu0 %v332
    %814 = vmatprep.subr.mxu0 0.0
    %815 = vmatpush2.msra.mxu0 %v331
    %816 = vmatprep.subr.mxu0 0.0
    %817 = vmatpush2.msra.mxu0 %v330
    %818 = vmatprep.subr.mxu0 0.0
    %819 = vmatpush2.msra.mxu0 %v329
    %820 = vmatprep.subr.mxu0 0.0
    %821 = vmatpush2.msra.mxu0 %v328
    %822 = vmatprep.subr.mxu0 0.0
    %823 = vmatpush2.msra.mxu0 %v327
    %824 = vmatprep.subr.mxu0 0.0
    %825 = vmatpush2.msra.mxu0 %v326
    %826 = vmatprep.subr.mxu0 0.0
    %827 = vmatpush2.msra.mxu0 %v325
    %828 = vmatprep.mubr.f32.mxu0 %v401
    %829 = vmatmul.mubr.f32.gmra.mxu0 %v399
    %v830 = vpop.f32.mrf.mxu0
    %v831 = vadd.f32 %v761, %v830
    %v832 = vpop.f32.mrf.mxu0
    %833 = vdwg.mxu0
    %v834 = vmul.f32 %v831, 0.2
    %v835 = vmax.f32 %v831, %v834
    %v836 = vld [vmem:[%s11] sm:$0xff]
    %v837 = vld [vmem:[%s11 + $0x8] sm:$0xff]
    %v838 = vld [vmem:[%s11 + $0x10] sm:$0xff]
    %v839 = vld [vmem:[%s11 + $0x18] sm:$0xff]
    %v840 = vld [vmem:[%s11 + $0x20] sm:$0xff]
    %v841 = vld [vmem:[%s11 + $0x28] sm:$0xff]
    %v842 = vld [vmem:[%s11 + $0x30] sm:$0xff]
    %v843 = vld [vmem:[%s11 + $0x38] sm:$0xff]
    %v844 = vld [vmem:[%s11 + $0x40] sm:$0xff]
    %v845 = vld [vmem:[%s11 + $0x48] sm:$0xff]
    %v846 = vld [vmem:[%s11 + $0x50] sm:$0xff]
    %v847 = vld [vmem:[%s11 + $0x58] sm:$0xff]
    %v848 = vld [vmem:[%s11 + $0x60] sm:$0xff]
    %v849 = vld [vmem:[%s11 + $0x68] sm:$0xff]
    %v850 = vld [vmem:[%s11 + $0x70] sm:$0xff]
    %v851 = vld [vmem:[%s11 + $0x78] sm:$0xff]
    %v852 = vld [vmem:[%s13] sm:$0x1]
    %v854 = vlaneseq
    %v855 = vshrl.u32 %v854, 7
    %v856 = vsub.s32 0, %v855
    %v857 = vrot.slane %v852, %v856
    %859 = vmatprep.subr.mxu0 0.0
    %860 = vmatpush1.msra.mxu0 %v851
    %861 = vmatprep.subr.mxu0 0.0
    %862 = vmatpush1.msra.mxu0 %v850
    %863 = vmatprep.subr.mxu0 0.0
    %864 = vmatpush1.msra.mxu0 %v849
    %865 = vmatprep.subr.mxu0 0.0
    %866 = vmatpush1.msra.mxu0 %v848
    %867 = vmatprep.subr.mxu0 0.0
    %868 = vmatpush1.msra.mxu0 %v847
    %869 = vmatprep.subr.mxu0 0.0
    %870 = vmatpush1.msra.mxu0 %v846
    %871 = vmatprep.subr.mxu0 0.0
    %872 = vmatpush1.msra.mxu0 %v845
    %873 = vmatprep.subr.mxu0 0.0
    %874 = vmatpush1.msra.mxu0 %v844
    %875 = vmatprep.subr.mxu0 0.0
    %876 = vmatpush1.msra.mxu0 %v843
    %877 = vmatprep.subr.mxu0 0.0
    %878 = vmatpush1.msra.mxu0 %v842
    %879 = vmatprep.subr.mxu0 0.0
    %880 = vmatpush1.msra.mxu0 %v841
    %881 = vmatprep.subr.mxu0 0.0
    %882 = vmatpush1.msra.mxu0 %v840
    %883 = vmatprep.subr.mxu0 0.0
    %884 = vmatpush1.msra.mxu0 %v839
    %885 = vmatprep.subr.mxu0 0.0
    %886 = vmatpush1.msra.mxu0 %v838
    %887 = vmatprep.subr.mxu0 0.0
    %888 = vmatpush1.msra.mxu0 %v837
    %889 = vmatprep.subr.mxu0 0.0
    %890 = vmatpush1.msra.mxu0 %v836
    %891 = vmatprep.subr.mxu0 0.0
    %892 = vmatpush2.msra.mxu0 0.0
    %893 = vmatprep.subr.mxu0 0.0
    %894 = vmatpush2.msra.mxu0 0.0
    %895 = vmatprep.subr.mxu0 0.0
    %896 = vmatpush2.msra.mxu0 0.0
    %897 = vmatprep.subr.mxu0 0.0
    %898 = vmatpush2.msra.mxu0 0.0
    %899 = vmatprep.subr.mxu0 0.0
    %900 = vmatpush2.msra.mxu0 0.0
    %901 = vmatprep.subr.mxu0 0.0
    %902 = vmatpush2.msra.mxu0 0.0
    %903 = vmatprep.subr.mxu0 0.0
    %904 = vmatpush2.msra.mxu0 0.0
    %905 = vmatprep.subr.mxu0 0.0
    %906 = vmatpush2.msra.mxu0 0.0
    %907 = vmatprep.subr.mxu0 0.0
    %908 = vmatpush2.msra.mxu0 0.0
    %909 = vmatprep.subr.mxu0 0.0
    %910 = vmatpush2.msra.mxu0 0.0
    %911 = vmatprep.subr.mxu0 0.0
    %912 = vmatpush2.msra.mxu0 0.0
    %913 = vmatprep.subr.mxu0 0.0
    %914 = vmatpush2.msra.mxu0 0.0
    %915 = vmatprep.subr.mxu0 0.0
    %916 = vmatpush2.msra.mxu0 0.0
    %917 = vmatprep.subr.mxu0 0.0
    %918 = vmatpush2.msra.mxu0 0.0
    %919 = vmatprep.subr.mxu0 0.0
    %920 = vmatpush2.msra.mxu0 0.0
    %921 = vmatprep.subr.mxu0 0.0
    %922 = vmatpush2.msra.mxu0 0.0
    %923 = vmatprep.mubr.f32.mxu0 0.0
    %924 = vmatmul.mubr.f32.gmra.mxu0 %v835
    %v925 = vpop.f32.mrf.mxu0
    %v926 = vadd.f32 %v857, %v925
    %v927 = vpop.f32.mrf.mxu0
    %928 = vdwg.mxu0
    %v929 = vmul.f32 %v926, 0.2
    %v930 = vmax.f32 %v926, %v929
    %v931 = vld [vmem:[%s15] sm:$0xff]
    %v932 = vld [vmem:[%s15 + $0x8] sm:$0xff]
    %v933 = vld [vmem:[%s15 + $0x10] sm:$0xff]
    %v934 = vld [vmem:[%s15 + $0x18] sm:$0xff]
    %v935 = vld [vmem:[%s15 + $0x20] sm:$0xff]
    %v936 = vld [vmem:[%s15 + $0x28] sm:$0xff]
    %v937 = vld [vmem:[%s15 + $0x30] sm:$0xff]
    %v938 = vld [vmem:[%s15 + $0x38] sm:$0xff]
    %v939 = vld [vmem:[%s17] sm:$0x1]
    %v941 = vlaneseq
    %v942 = vshrl.u32 %v941, 7
    %v943 = vsub.s32 0, %v942
    %v944 = vrot.slane %v939, %v943
    %vm946 = vcmask 523264
    %v948 = vsel %vm946, %v930, 0
    %950 = vmatprep.subr.mxu0 0.0
    %951 = vmatpush1.msra.mxu0 0.0
    %952 = vmatprep.subr.mxu0 0.0
    %953 = vmatpush1.msra.mxu0 0.0
    %954 = vmatprep.subr.mxu0 0.0
    %955 = vmatpush1.msra.mxu0 0.0
    %956 = vmatprep.subr.mxu0 0.0
    %957 = vmatpush1.msra.mxu0 0.0
    %958 = vmatprep.subr.mxu0 0.0
    %959 = vmatpush1.msra.mxu0 0.0
    %960 = vmatprep.subr.mxu0 0.0
    %961 = vmatpush1.msra.mxu0 0.0
    %962 = vmatprep.subr.mxu0 0.0
    %963 = vmatpush1.msra.mxu0 0.0
    %964 = vmatprep.subr.mxu0 0.0
    %965 = vmatpush1.msra.mxu0 0.0
    %966 = vmatprep.subr.mxu0 0.0
    %967 = vmatpush1.msra.mxu0 %v938
    %968 = vmatprep.subr.mxu0 0.0
    %969 = vmatpush1.msra.mxu0 %v937
    %970 = vmatprep.subr.mxu0 0.0
    %971 = vmatpush1.msra.mxu0 %v936
    %972 = vmatprep.subr.mxu0 0.0
    %973 = vmatpush1.msra.mxu0 %v935
    %974 = vmatprep.subr.mxu0 0.0
    %975 = vmatpush1.msra.mxu0 %v934
    %976 = vmatprep.subr.mxu0 0.0
    %977 = vmatpush1.msra.mxu0 %v933
    %978 = vmatprep.subr.mxu0 0.0
    %979 = vmatpush1.msra.mxu0 %v932
    %980 = vmatprep.subr.mxu0 0.0
    %981 = vmatpush1.msra.mxu0 %v931
    %982 = vmatprep.subr.mxu0 0.0
    %983 = vmatpush2.msra.mxu0 0.0
    %984 = vmatprep.subr.mxu0 0.0
    %985 = vmatpush2.msra.mxu0 0.0
    %986 = vmatprep.subr.mxu0 0.0
    %987 = vmatpush2.msra.mxu0 0.0
    %988 = vmatprep.subr.mxu0 0.0
    %989 = vmatpush2.msra.mxu0 0.0
    %990 = vmatprep.subr.mxu0 0.0
    %991 = vmatpush2.msra.mxu0 0.0
    %992 = vmatprep.subr.mxu0 0.0
    %993 = vmatpush2.msra.mxu0 0.0
    %994 = vmatprep.subr.mxu0 0.0
    %995 = vmatpush2.msra.mxu0 0.0
    %996 = vmatprep.subr.mxu0 0.0
    %997 = vmatpush2.msra.mxu0 0.0
    %998 = vmatprep.subr.mxu0 0.0
    %999 = vmatpush2.msra.mxu0 0.0
    %1000 = vmatprep.subr.mxu0 0.0
    %1001 = vmatpush2.msra.mxu0 0.0
    %1002 = vmatprep.subr.mxu0 0.0
    %1003 = vmatpush2.msra.mxu0 0.0
    %1004 = vmatprep.subr.mxu0 0.0
    %1005 = vmatpush2.msra.mxu0 0.0
    %1006 = vmatprep.subr.mxu0 0.0
    %1007 = vmatpush2.msra.mxu0 0.0
    %1008 = vmatprep.subr.mxu0 0.0
    %1009 = vmatpush2.msra.mxu0 0.0
    %1010 = vmatprep.subr.mxu0 0.0
    %1011 = vmatpush2.msra.mxu0 0.0
    %1012 = vmatprep.subr.mxu0 0.0
    %1013 = vmatpush2.msra.mxu0 0.0
    %1014 = vmatprep.mubr.f32.mxu0 0.0
    %1015 = vmatmul.mubr.f32.gmra.mxu0 %v948
    %v1016 = vpop.f32.mrf.mxu0
    %v1017 = vadd.f32 %v944, %v1016
    %v1018 = vpop.f32.mrf.mxu0
    %1019 = vdwg.mxu0
    %v1020 = vld [vmem:[%s3] sm:$0x3]
    %v1021 = vld [vmem:[%s19] sm:$0xff]
    %v1022 = vld [vmem:[%s21] sm:$0x1]
    %v1024 = vlaneseq
    %v1025 = vshrl.u32 %v1024, 7
    %v1026 = vsub.s32 0, %v1025
    %v1027 = vrot.slane %v1022, %v1026
    %vm1029 = vcmask 64512
    %v1031 = vsel %vm1029, %v1020, 0
    %1033 = vmatprep.subr.mxu0 0.0
    %1034 = vmatpush1.msra.mxu0 0.0
    %1035 = vmatprep.subr.mxu0 0.0
    %1036 = vmatpush1.msra.mxu0 0.0
    %1037 = vmatprep.subr.mxu0 0.0
    %1038 = vmatpush1.msra.mxu0 0.0
    %1039 = vmatprep.subr.mxu0 0.0
    %1040 = vmatpush1.msra.mxu0 0.0
    %1041 = vmatprep.subr.mxu0 0.0
    %1042 = vmatpush1.msra.mxu0 0.0
    %1043 = vmatprep.subr.mxu0 0.0
    %1044 = vmatpush1.msra.mxu0 0.0
    %1045 = vmatprep.subr.mxu0 0.0
    %1046 = vmatpush1.msra.mxu0 0.0
    %1047 = vmatprep.subr.mxu0 0.0
    %1048 = vmatpush1.msra.mxu0 0.0
    %1049 = vmatprep.subr.mxu0 0.0
    %1050 = vmatpush1.msra.mxu0 0.0
    %1051 = vmatprep.subr.mxu0 0.0
    %1052 = vmatpush1.msra.mxu0 0.0
    %1053 = vmatprep.subr.mxu0 0.0
    %1054 = vmatpush1.msra.mxu0 0.0
    %1055 = vmatprep.subr.mxu0 0.0
    %1056 = vmatpush1.msra.mxu0 0.0
    %1057 = vmatprep.subr.mxu0 0.0
    %1058 = vmatpush1.msra.mxu0 0.0
    %1059 = vmatprep.subr.mxu0 0.0
    %1060 = vmatpush1.msra.mxu0 0.0
    %1061 = vmatprep.subr.mxu0 0.0
    %1062 = vmatpush1.msra.mxu0 0.0
    %1063 = vmatprep.subr.mxu0 0.0
    %1064 = vmatpush1.msra.mxu0 %v1021
    %1065 = vmatprep.subr.mxu0 0.0
    %1066 = vmatpush2.msra.mxu0 0.0
    %1067 = vmatprep.subr.mxu0 0.0
    %1068 = vmatpush2.msra.mxu0 0.0
    %1069 = vmatprep.subr.mxu0 0.0
    %1070 = vmatpush2.msra.mxu0 0.0
    %1071 = vmatprep.subr.mxu0 0.0
    %1072 = vmatpush2.msra.mxu0 0.0
    %1073 = vmatprep.subr.mxu0 0.0
    %1074 = vmatpush2.msra.mxu0 0.0
    %1075 = vmatprep.subr.mxu0 0.0
    %1076 = vmatpush2.msra.mxu0 0.0
    %1077 = vmatprep.subr.mxu0 0.0
    %1078 = vmatpush2.msra.mxu0 0.0
    %1079 = vmatprep.subr.mxu0 0.0
    %1080 = vmatpush2.msra.mxu0 0.0
    %1081 = vmatprep.subr.mxu0 0.0
    %1082 = vmatpush2.msra.mxu0 0.0
    %1083 = vmatprep.subr.mxu0 0.0
    %1084 = vmatpush2.msra.mxu0 0.0
    %1085 = vmatprep.subr.mxu0 0.0
    %1086 = vmatpush2.msra.mxu0 0.0
    %1087 = vmatprep.subr.mxu0 0.0
    %1088 = vmatpush2.msra.mxu0 0.0
    %1089 = vmatprep.subr.mxu0 0.0
    %1090 = vmatpush2.msra.mxu0 0.0
    %1091 = vmatprep.subr.mxu0 0.0
    %1092 = vmatpush2.msra.mxu0 0.0
    %1093 = vmatprep.subr.mxu0 0.0
    %1094 = vmatpush2.msra.mxu0 0.0
    %1095 = vmatprep.subr.mxu0 0.0
    %1096 = vmatpush2.msra.mxu0 0.0
    %1097 = vmatprep.mubr.f32.mxu0 0.0
    %1098 = vmatmul.mubr.f32.gmra.mxu0 %v1031
    %v1099 = vpop.f32.mrf.mxu0
    %v1100 = vadd.f32 %v1027, %v1099
    %v1101 = vpop.f32.mrf.mxu0
    %1102 = vdwg.mxu0
    %v1103 = vmul.f32 %v1100, 0.2
    %v1104 = vmax.f32 %v1100, %v1103
    %v1105 = vld [vmem:[%s23] sm:$0xff]
    %v1106 = vld [vmem:[%s25] sm:$0x1]
    %v1108 = vlaneseq
    %v1109 = vshrl.u32 %v1108, 7
    %v1110 = vsub.s32 0, %v1109
    %v1111 = vrot.slane %v1106, %v1110
    %v1114 = vsel %vm1029, %v1104, 0
    %1116 = vmatprep.subr.mxu0 0.0
    %1117 = vmatpush1.msra.mxu0 0.0
    %1118 = vmatprep.subr.mxu0 0.0
    %1119 = vmatpush1.msra.mxu0 0.0
    %1120 = vmatprep.subr.mxu0 0.0
    %1121 = vmatpush1.msra.mxu0 0.0
    %1122 = vmatprep.subr.mxu0 0.0
    %1123 = vmatpush1.msra.mxu0 0.0
    %1124 = vmatprep.subr.mxu0 0.0
    %1125 = vmatpush1.msra.mxu0 0.0
    %1126 = vmatprep.subr.mxu0 0.0
    %1127 = vmatpush1.msra.mxu0 0.0
    %1128 = vmatprep.subr.mxu0 0.0
    %1129 = vmatpush1.msra.mxu0 0.0
    %1130 = vmatprep.subr.mxu0 0.0
    %1131 = vmatpush1.msra.mxu0 0.0
    %1132 = vmatprep.subr.mxu0 0.0
    %1133 = vmatpush1.msra.mxu0 0.0
    %1134 = vmatprep.subr.mxu0 0.0
    %1135 = vmatpush1.msra.mxu0 0.0
    %1136 = vmatprep.subr.mxu0 0.0
    %1137 = vmatpush1.msra.mxu0 0.0
    %1138 = vmatprep.subr.mxu0 0.0
    %1139 = vmatpush1.msra.mxu0 0.0
    %1140 = vmatprep.subr.mxu0 0.0
    %1141 = vmatpush1.msra.mxu0 0.0
    %1142 = vmatprep.subr.mxu0 0.0
    %1143 = vmatpush1.msra.mxu0 0.0
    %1144 = vmatprep.subr.mxu0 0.0
    %1145 = vmatpush1.msra.mxu0 0.0
    %1146 = vmatprep.subr.mxu0 0.0
    %1147 = vmatpush1.msra.mxu0 %v1105
    %1148 = vmatprep.subr.mxu0 0.0
    %1149 = vmatpush2.msra.mxu0 0.0
    %1150 = vmatprep.subr.mxu0 0.0
    %1151 = vmatpush2.msra.mxu0 0.0
    %1152 = vmatprep.subr.mxu0 0.0
    %1153 = vmatpush2.msra.mxu0 0.0
    %1154 = vmatprep.subr.mxu0 0.0
    %1155 = vmatpush2.msra.mxu0 0.0
    %1156 = vmatprep.subr.mxu0 0.0
    %1157 = vmatpush2.msra.mxu0 0.0
    %1158 = vmatprep.subr.mxu0 0.0
    %1159 = vmatpush2.msra.mxu0 0.0
    %1160 = vmatprep.subr.mxu0 0.0
    %1161 = vmatpush2.msra.mxu0 0.0
    %1162 = vmatprep.subr.mxu0 0.0
    %1163 = vmatpush2.msra.mxu0 0.0
    %1164 = vmatprep.subr.mxu0 0.0
    %1165 = vmatpush2.msra.mxu0 0.0
    %1166 = vmatprep.subr.mxu0 0.0
    %1167 = vmatpush2.msra.mxu0 0.0
    %1168 = vmatprep.subr.mxu0 0.0
    %1169 = vmatpush2.msra.mxu0 0.0
    %1170 = vmatprep.subr.mxu0 0.0
    %1171 = vmatpush2.msra.mxu0 0.0
    %1172 = vmatprep.subr.mxu0 0.0
    %1173 = vmatpush2.msra.mxu0 0.0
    %1174 = vmatprep.subr.mxu0 0.0
    %1175 = vmatpush2.msra.mxu0 0.0
    %1176 = vmatprep.subr.mxu0 0.0
    %1177 = vmatpush2.msra.mxu0 0.0
    %1178 = vmatprep.subr.mxu0 0.0
    %1179 = vmatpush2.msra.mxu0 0.0
    %1180 = vmatprep.mubr.f32.mxu0 0.0
    %1181 = vmatmul.mubr.f32.gmra.mxu0 %v1114
    %v1182 = vpop.f32.mrf.mxu0
    %v1183 = vadd.f32 %v1111, %v1182
    %v1184 = vpop.f32.mrf.mxu0
    %1185 = vdwg.mxu0
    %v1186 = vmul.f32 %v1183, 0.2
    %v1187 = vmax.f32 %v1183, %v1186
    %v1188 = vld [vmem:[%s27] sm:$0xff]
    %v1190 = vsel %vm1029, %v1187, 0
    %1192 = vmatprep.subr.mxu0 0.0
    %1193 = vmatpush1.msra.mxu0 0.0
    %1194 = vmatprep.subr.mxu0 0.0
    %1195 = vmatpush1.msra.mxu0 0.0
    %1196 = vmatprep.subr.mxu0 0.0
    %1197 = vmatpush1.msra.mxu0 0.0
    %1198 = vmatprep.subr.mxu0 0.0
    %1199 = vmatpush1.msra.mxu0 0.0
    %1200 = vmatprep.subr.mxu0 0.0
    %1201 = vmatpush1.msra.mxu0 0.0
    %1202 = vmatprep.subr.mxu0 0.0
    %1203 = vmatpush1.msra.mxu0 0.0
    %1204 = vmatprep.subr.mxu0 0.0
    %1205 = vmatpush1.msra.mxu0 0.0
    %1206 = vmatprep.subr.mxu0 0.0
    %1207 = vmatpush1.msra.mxu0 0.0
    %1208 = vmatprep.subr.mxu0 0.0
    %1209 = vmatpush1.msra.mxu0 0.0
    %1210 = vmatprep.subr.mxu0 0.0
    %1211 = vmatpush1.msra.mxu0 0.0
    %1212 = vmatprep.subr.mxu0 0.0
    %1213 = vmatpush1.msra.mxu0 0.0
    %1214 = vmatprep.subr.mxu0 0.0
    %1215 = vmatpush1.msra.mxu0 0.0
    %1216 = vmatprep.subr.mxu0 0.0
    %1217 = vmatpush1.msra.mxu0 0.0
    %1218 = vmatprep.subr.mxu0 0.0
    %1219 = vmatpush1.msra.mxu0 0.0
    %1220 = vmatprep.subr.mxu0 0.0
    %1221 = vmatpush1.msra.mxu0 0.0
    %1222 = vmatprep.subr.mxu0 0.0
    %1223 = vmatpush1.msra.mxu0 %v1188
    %1224 = vmatprep.subr.mxu0 0.0
    %1225 = vmatpush2.msra.mxu0 0.0
    %1226 = vmatprep.subr.mxu0 0.0
    %1227 = vmatpush2.msra.mxu0 0.0
    %1228 = vmatprep.subr.mxu0 0.0
    %1229 = vmatpush2.msra.mxu0 0.0
    %1230 = vmatprep.subr.mxu0 0.0
    %1231 = vmatpush2.msra.mxu0 0.0
    %1232 = vmatprep.subr.mxu0 0.0
    %1233 = vmatpush2.msra.mxu0 0.0
    %1234 = vmatprep.subr.mxu0 0.0
    %1235 = vmatpush2.msra.mxu0 0.0
    %1236 = vmatprep.subr.mxu0 0.0
    %1237 = vmatpush2.msra.mxu0 0.0
    %1238 = vmatprep.subr.mxu0 0.0
    %1239 = vmatpush2.msra.mxu0 0.0
    %1240 = vmatprep.subr.mxu0 0.0
    %1241 = vmatpush2.msra.mxu0 0.0
    %1242 = vmatprep.subr.mxu0 0.0
    %1243 = vmatpush2.msra.mxu0 0.0
    %1244 = vmatprep.subr.mxu0 0.0
    %1245 = vmatpush2.msra.mxu0 0.0
    %1246 = vmatprep.subr.mxu0 0.0
    %1247 = vmatpush2.msra.mxu0 0.0
    %1248 = vmatprep.subr.mxu0 0.0
    %1249 = vmatpush2.msra.mxu0 0.0
    %1250 = vmatprep.subr.mxu0 0.0
    %1251 = vmatpush2.msra.mxu0 0.0
    %1252 = vmatprep.subr.mxu0 0.0
    %1253 = vmatpush2.msra.mxu0 0.0
    %1254 = vmatprep.subr.mxu0 0.0
    %1255 = vmatpush2.msra.mxu0 0.0
    %1256 = vmatprep.mubr.f32.mxu0 0.0
    %1257 = vmatmul.mubr.f32.gmra.mxu0 %v1190
    %v1258 = vpop.f32.mrf.mxu0
    %v1259 = vadd.f32 0.0, %v1258
    %v1260 = vpop.f32.mrf.mxu0
    %1261 = vdwg.mxu0
    %v1262 = vadd.f32 %v1017, %v1259
    %v1263 = vld [vmem:[%s29] sm:$0x1]
    %v1265 = vlaneseq
    %v1266 = vshrl.u32 %v1265, 7
    %v1267 = vsub.s32 0, %v1266
    %v1268 = vrot.slane %v1263, %v1267
    %v1270 = vadd.f32 %v1262, %v1268
    %v1271 = vld [vmem:[%s31] sm:$0xff]
    %v1272 = vld [vmem:[%s31 + $0x8] sm:$0xff]
    %v1273 = vld [vmem:[%s31 + $0x10] sm:$0xff]
    %v1274 = vld [vmem:[%s31 + $0x18] sm:$0xff]
    %v1275 = vld [vmem:[%s33] sm:$0x1]
    %v1277 = vlaneseq
    %v1278 = vshrl.u32 %v1277, 7
    %v1279 = vsub.s32 0, %v1278
    %v1280 = vrot.slane %v1275, %v1279
    %vm1282 = vcmask 261120
    %v1284 = vsel %vm1282, %v1270, 0
    %1286 = vmatprep.subr.mxu0 0.0
    %1287 = vmatpush1.msra.mxu0 0.0
    %1288 = vmatprep.subr.mxu0 0.0
    %1289 = vmatpush1.msra.mxu0 0.0
    %1290 = vmatprep.subr.mxu0 0.0
    %1291 = vmatpush1.msra.mxu0 0.0
    %1292 = vmatprep.subr.mxu0 0.0
    %1293 = vmatpush1.msra.mxu0 0.0
    %1294 = vmatprep.subr.mxu0 0.0
    %1295 = vmatpush1.msra.mxu0 0.0
    %1296 = vmatprep.subr.mxu0 0.0
    %1297 = vmatpush1.msra.mxu0 0.0
    %1298 = vmatprep.subr.mxu0 0.0
    %1299 = vmatpush1.msra.mxu0 0.0
    %1300 = vmatprep.subr.mxu0 0.0
    %1301 = vmatpush1.msra.mxu0 0.0
    %1302 = vmatprep.subr.mxu0 0.0
    %1303 = vmatpush1.msra.mxu0 0.0
    %1304 = vmatprep.subr.mxu0 0.0
    %1305 = vmatpush1.msra.mxu0 0.0
    %1306 = vmatprep.subr.mxu0 0.0
    %1307 = vmatpush1.msra.mxu0 0.0
    %1308 = vmatprep.subr.mxu0 0.0
    %1309 = vmatpush1.msra.mxu0 0.0
    %1310 = vmatprep.subr.mxu0 0.0
    %1311 = vmatpush1.msra.mxu0 %v1274
    %1312 = vmatprep.subr.mxu0 0.0
    %1313 = vmatpush1.msra.mxu0 %v1273
    %1314 = vmatprep.subr.mxu0 0.0
    %1315 = vmatpush1.msra.mxu0 %v1272
    %1316 = vmatprep.subr.mxu0 0.0
    %1317 = vmatpush1.msra.mxu0 %v1271
    %1318 = vmatprep.subr.mxu0 0.0
    %1319 = vmatpush2.msra.mxu0 0.0
    %1320 = vmatprep.subr.mxu0 0.0
    %1321 = vmatpush2.msra.mxu0 0.0
    %1322 = vmatprep.subr.mxu0 0.0
    %1323 = vmatpush2.msra.mxu0 0.0
    %1324 = vmatprep.subr.mxu0 0.0
    %1325 = vmatpush2.msra.mxu0 0.0
    %1326 = vmatprep.subr.mxu0 0.0
    %1327 = vmatpush2.msra.mxu0 0.0
    %1328 = vmatprep.subr.mxu0 0.0
    %1329 = vmatpush2.msra.mxu0 0.0
    %1330 = vmatprep.subr.mxu0 0.0
    %1331 = vmatpush2.msra.mxu0 0.0
    %1332 = vmatprep.subr.mxu0 0.0
    %1333 = vmatpush2.msra.mxu0 0.0
    %1334 = vmatprep.subr.mxu0 0.0
    %1335 = vmatpush2.msra.mxu0 0.0
    %1336 = vmatprep.subr.mxu0 0.0
    %1337 = vmatpush2.msra.mxu0 0.0
    %1338 = vmatprep.subr.mxu0 0.0
    %1339 = vmatpush2.msra.mxu0 0.0
    %1340 = vmatprep.subr.mxu0 0.0
    %1341 = vmatpush2.msra.mxu0 0.0
    %1342 = vmatprep.subr.mxu0 0.0
    %1343 = vmatpush2.msra.mxu0 0.0
    %1344 = vmatprep.subr.mxu0 0.0
    %1345 = vmatpush2.msra.mxu0 0.0
    %1346 = vmatprep.subr.mxu0 0.0
    %1347 = vmatpush2.msra.mxu0 0.0
    %1348 = vmatprep.subr.mxu0 0.0
    %1349 = vmatpush2.msra.mxu0 0.0
    %1350 = vmatprep.mubr.f32.mxu0 0.0
    %1351 = vmatmul.mubr.f32.gmra.mxu0 %v1284
    %v1352 = vpop.f32.mrf.mxu0
    %v1353 = vadd.f32 %v1280, %v1352
    %v1354 = vpop.f32.mrf.mxu0
    %1355 = vdwg.mxu0
    %v1356 = vld [vmem:[%s35] sm:$0xff]
    %v1357 = vld [vmem:[%s35 + $0x8] sm:$0xff]
    %v1358 = vld [vmem:[%s35 + $0x10] sm:$0xff]
    %v1359 = vld [vmem:[%s35 + $0x18] sm:$0xff]
    %v1360 = vld [vmem:[%s37] sm:$0x1]
    %v1362 = vlaneseq
    %v1363 = vshrl.u32 %v1362, 7
    %v1364 = vsub.s32 0, %v1363
    %v1365 = vrot.slane %v1360, %v1364
    %v1368 = vsel %vm1282, %v1353, 0
    %1370 = vmatprep.subr.mxu0 0.0
    %1371 = vmatpush1.msra.mxu0 0.0
    %1372 = vmatprep.subr.mxu0 0.0
    %1373 = vmatpush1.msra.mxu0 0.0
    %1374 = vmatprep.subr.mxu0 0.0
    %1375 = vmatpush1.msra.mxu0 0.0
    %1376 = vmatprep.subr.mxu0 0.0
    %1377 = vmatpush1.msra.mxu0 0.0
    %1378 = vmatprep.subr.mxu0 0.0
    %1379 = vmatpush1.msra.mxu0 0.0
    %1380 = vmatprep.subr.mxu0 0.0
    %1381 = vmatpush1.msra.mxu0 0.0
    %1382 = vmatprep.subr.mxu0 0.0
    %1383 = vmatpush1.msra.mxu0 0.0
    %1384 = vmatprep.subr.mxu0 0.0
    %1385 = vmatpush1.msra.mxu0 0.0
    %1386 = vmatprep.subr.mxu0 0.0
    %1387 = vmatpush1.msra.mxu0 0.0
    %1388 = vmatprep.subr.mxu0 0.0
    %1389 = vmatpush1.msra.mxu0 0.0
    %1390 = vmatprep.subr.mxu0 0.0
    %1391 = vmatpush1.msra.mxu0 0.0
    %1392 = vmatprep.subr.mxu0 0.0
    %1393 = vmatpush1.msra.mxu0 0.0
    %1394 = vmatprep.subr.mxu0 0.0
    %1395 = vmatpush1.msra.mxu0 %v1359
    %1396 = vmatprep.subr.mxu0 0.0
    %1397 = vmatpush1.msra.mxu0 %v1358
    %1398 = vmatprep.subr.mxu0 0.0
    %1399 = vmatpush1.msra.mxu0 %v1357
    %1400 = vmatprep.subr.mxu0 0.0
    %1401 = vmatpush1.msra.mxu0 %v1356
    %1402 = vmatprep.subr.mxu0 0.0
    %1403 = vmatpush2.msra.mxu0 0.0
    %1404 = vmatprep.subr.mxu0 0.0
    %1405 = vmatpush2.msra.mxu0 0.0
    %1406 = vmatprep.subr.mxu0 0.0
    %1407 = vmatpush2.msra.mxu0 0.0
    %1408 = vmatprep.subr.mxu0 0.0
    %1409 = vmatpush2.msra.mxu0 0.0
    %1410 = vmatprep.subr.mxu0 0.0
    %1411 = vmatpush2.msra.mxu0 0.0
    %1412 = vmatprep.subr.mxu0 0.0
    %1413 = vmatpush2.msra.mxu0 0.0
    %1414 = vmatprep.subr.mxu0 0.0
    %1415 = vmatpush2.msra.mxu0 0.0
    %1416 = vmatprep.subr.mxu0 0.0
    %1417 = vmatpush2.msra.mxu0 0.0
    %1418 = vmatprep.subr.mxu0 0.0
    %1419 = vmatpush2.msra.mxu0 0.0
    %1420 = vmatprep.subr.mxu0 0.0
    %1421 = vmatpush2.msra.mxu0 0.0
    %1422 = vmatprep.subr.mxu0 0.0
    %1423 = vmatpush2.msra.mxu0 0.0
    %1424 = vmatprep.subr.mxu0 0.0
    %1425 = vmatpush2.msra.mxu0 0.0
    %1426 = vmatprep.subr.mxu0 0.0
    %1427 = vmatpush2.msra.mxu0 0.0
    %1428 = vmatprep.subr.mxu0 0.0
    %1429 = vmatpush2.msra.mxu0 0.0
    %1430 = vmatprep.subr.mxu0 0.0
    %1431 = vmatpush2.msra.mxu0 0.0
    %1432 = vmatprep.subr.mxu0 0.0
    %1433 = vmatpush2.msra.mxu0 0.0
    %1434 = vmatprep.mubr.f32.mxu0 0.0
    %1435 = vmatmul.mubr.f32.gmra.mxu0 %v1368
    %v1436 = vpop.f32.mrf.mxu0
    %v1437 = vadd.f32 %v1365, %v1436
    %v1438 = vpop.f32.mrf.mxu0
    %1439 = vdwg.mxu0
    %v1440 = vmax.f32 %v1437, 0.0
    %v1441 = vld [vmem:[%s39] sm:$0xff]
    %v1442 = vld [vmem:[%s39 + $0x8] sm:$0xff]
    %v1443 = vld [vmem:[%s39 + $0x10] sm:$0xff]
    %v1444 = vld [vmem:[%s39 + $0x18] sm:$0xff]
    %v1445 = vld [vmem:[%s41] sm:$0x1]
    %v1447 = vlaneseq
    %v1448 = vshrl.u32 %v1447, 7
    %v1449 = vsub.s32 0, %v1448
    %v1450 = vrot.slane %v1445, %v1449
    %v1453 = vsel %vm1282, %v1440, 0
    %1455 = vmatprep.subr.mxu0 0.0
    %1456 = vmatpush1.msra.mxu0 0.0
    %1457 = vmatprep.subr.mxu0 0.0
    %1458 = vmatpush1.msra.mxu0 0.0
    %1459 = vmatprep.subr.mxu0 0.0
    %1460 = vmatpush1.msra.mxu0 0.0
    %1461 = vmatprep.subr.mxu0 0.0
    %1462 = vmatpush1.msra.mxu0 0.0
    %1463 = vmatprep.subr.mxu0 0.0
    %1464 = vmatpush1.msra.mxu0 0.0
    %1465 = vmatprep.subr.mxu0 0.0
    %1466 = vmatpush1.msra.mxu0 0.0
    %1467 = vmatprep.subr.mxu0 0.0
    %1468 = vmatpush1.msra.mxu0 0.0
    %1469 = vmatprep.subr.mxu0 0.0
    %1470 = vmatpush1.msra.mxu0 0.0
    %1471 = vmatprep.subr.mxu0 0.0
    %1472 = vmatpush1.msra.mxu0 0.0
    %1473 = vmatprep.subr.mxu0 0.0
    %1474 = vmatpush1.msra.mxu0 0.0
    %1475 = vmatprep.subr.mxu0 0.0
    %1476 = vmatpush1.msra.mxu0 0.0
    %1477 = vmatprep.subr.mxu0 0.0
    %1478 = vmatpush1.msra.mxu0 0.0
    %1479 = vmatprep.subr.mxu0 0.0
    %1480 = vmatpush1.msra.mxu0 %v1444
    %1481 = vmatprep.subr.mxu0 0.0
    %1482 = vmatpush1.msra.mxu0 %v1443
    %1483 = vmatprep.subr.mxu0 0.0
    %1484 = vmatpush1.msra.mxu0 %v1442
    %1485 = vmatprep.subr.mxu0 0.0
    %1486 = vmatpush1.msra.mxu0 %v1441
    %1487 = vmatprep.subr.mxu0 0.0
    %1488 = vmatpush2.msra.mxu0 0.0
    %1489 = vmatprep.subr.mxu0 0.0
    %1490 = vmatpush2.msra.mxu0 0.0
    %1491 = vmatprep.subr.mxu0 0.0
    %1492 = vmatpush2.msra.mxu0 0.0
    %1493 = vmatprep.subr.mxu0 0.0
    %1494 = vmatpush2.msra.mxu0 0.0
    %1495 = vmatprep.subr.mxu0 0.0
    %1496 = vmatpush2.msra.mxu0 0.0
    %1497 = vmatprep.subr.mxu0 0.0
    %1498 = vmatpush2.msra.mxu0 0.0
    %1499 = vmatprep.subr.mxu0 0.0
    %1500 = vmatpush2.msra.mxu0 0.0
    %1501 = vmatprep.subr.mxu0 0.0
    %1502 = vmatpush2.msra.mxu0 0.0
    %1503 = vmatprep.subr.mxu0 0.0
    %1504 = vmatpush2.msra.mxu0 0.0
    %1505 = vmatprep.subr.mxu0 0.0
    %1506 = vmatpush2.msra.mxu0 0.0
    %1507 = vmatprep.subr.mxu0 0.0
    %1508 = vmatpush2.msra.mxu0 0.0
    %1509 = vmatprep.subr.mxu0 0.0
    %1510 = vmatpush2.msra.mxu0 0.0
    %1511 = vmatprep.subr.mxu0 0.0
    %1512 = vmatpush2.msra.mxu0 0.0
    %1513 = vmatprep.subr.mxu0 0.0
    %1514 = vmatpush2.msra.mxu0 0.0
    %1515 = vmatprep.subr.mxu0 0.0
    %1516 = vmatpush2.msra.mxu0 0.0
    %1517 = vmatprep.subr.mxu0 0.0
    %1518 = vmatpush2.msra.mxu0 0.0
    %1519 = vmatprep.mubr.f32.mxu0 0.0
    %1520 = vmatmul.mubr.f32.gmra.mxu0 %v1453
    %v1521 = vpop.f32.mrf.mxu0
    %v1522 = vadd.f32 %v1450, %v1521
    %v1523 = vpop.f32.mrf.mxu0
    %1524 = vdwg.mxu0
    %v1525 = vmax.f32 %v1522, 0.0
    %v1526 = vld [vmem:[%s43] sm:$0xff]
    %v1527 = vld [vmem:[%s43 + $0x8] sm:$0xff]
    %v1528 = vld [vmem:[%s43 + $0x10] sm:$0xff]
    %v1529 = vld [vmem:[%s43 + $0x18] sm:$0xff]
    %v1530 = vld [vmem:[%s45] sm:$0x1]
    %v1532 = vlaneseq
    %v1533 = vshrl.u32 %v1532, 7
    %v1534 = vsub.s32 0, %v1533
    %v1535 = vrot.slane %v1530, %v1534
    %v1538 = vsel %vm1282, %v1525, 0
    %1540 = vmatprep.subr.mxu0 0.0
    %1541 = vmatpush1.msra.mxu0 0.0
    %1542 = vmatprep.subr.mxu0 0.0
    %1543 = vmatpush1.msra.mxu0 0.0
    %1544 = vmatprep.subr.mxu0 0.0
    %1545 = vmatpush1.msra.mxu0 0.0
    %1546 = vmatprep.subr.mxu0 0.0
    %1547 = vmatpush1.msra.mxu0 0.0
    %1548 = vmatprep.subr.mxu0 0.0
    %1549 = vmatpush1.msra.mxu0 0.0
    %1550 = vmatprep.subr.mxu0 0.0
    %1551 = vmatpush1.msra.mxu0 0.0
    %1552 = vmatprep.subr.mxu0 0.0
    %1553 = vmatpush1.msra.mxu0 0.0
    %1554 = vmatprep.subr.mxu0 0.0
    %1555 = vmatpush1.msra.mxu0 0.0
    %1556 = vmatprep.subr.mxu0 0.0
    %1557 = vmatpush1.msra.mxu0 0.0
    %1558 = vmatprep.subr.mxu0 0.0
    %1559 = vmatpush1.msra.mxu0 0.0
    %1560 = vmatprep.subr.mxu0 0.0
    %1561 = vmatpush1.msra.mxu0 0.0
    %1562 = vmatprep.subr.mxu0 0.0
    %1563 = vmatpush1.msra.mxu0 0.0
    %1564 = vmatprep.subr.mxu0 0.0
    %1565 = vmatpush1.msra.mxu0 %v1529
    %1566 = vmatprep.subr.mxu0 0.0
    %1567 = vmatpush1.msra.mxu0 %v1528
    %1568 = vmatprep.subr.mxu0 0.0
    %1569 = vmatpush1.msra.mxu0 %v1527
    %1570 = vmatprep.subr.mxu0 0.0
    %1571 = vmatpush1.msra.mxu0 %v1526
    %1572 = vmatprep.subr.mxu0 0.0
    %1573 = vmatpush2.msra.mxu0 0.0
    %1574 = vmatprep.subr.mxu0 0.0
    %1575 = vmatpush2.msra.mxu0 0.0
    %1576 = vmatprep.subr.mxu0 0.0
    %1577 = vmatpush2.msra.mxu0 0.0
    %1578 = vmatprep.subr.mxu0 0.0
    %1579 = vmatpush2.msra.mxu0 0.0
    %1580 = vmatprep.subr.mxu0 0.0
    %1581 = vmatpush2.msra.mxu0 0.0
    %1582 = vmatprep.subr.mxu0 0.0
    %1583 = vmatpush2.msra.mxu0 0.0
    %1584 = vmatprep.subr.mxu0 0.0
    %1585 = vmatpush2.msra.mxu0 0.0
    %1586 = vmatprep.subr.mxu0 0.0
    %1587 = vmatpush2.msra.mxu0 0.0
    %1588 = vmatprep.subr.mxu0 0.0
    %1589 = vmatpush2.msra.mxu0 0.0
    %1590 = vmatprep.subr.mxu0 0.0
    %1591 = vmatpush2.msra.mxu0 0.0
    %1592 = vmatprep.subr.mxu0 0.0
    %1593 = vmatpush2.msra.mxu0 0.0
    %1594 = vmatprep.subr.mxu0 0.0
    %1595 = vmatpush2.msra.mxu0 0.0
    %1596 = vmatprep.subr.mxu0 0.0
    %1597 = vmatpush2.msra.mxu0 0.0
    %1598 = vmatprep.subr.mxu0 0.0
    %1599 = vmatpush2.msra.mxu0 0.0
    %1600 = vmatprep.subr.mxu0 0.0
    %1601 = vmatpush2.msra.mxu0 0.0
    %1602 = vmatprep.subr.mxu0 0.0
    %1603 = vmatpush2.msra.mxu0 0.0
    %1604 = vmatprep.mubr.f32.mxu0 0.0
    %1605 = vmatmul.mubr.f32.gmra.mxu0 %v1538
    %v1606 = vpop.f32.mrf.mxu0
    %v1607 = vadd.f32 %v1535, %v1606
    %v1608 = vpop.f32.mrf.mxu0
    %1609 = vdwg.mxu0
    %v1610 = vmax.f32 %v1607, 0.0
    %v1611 = vld [vmem:[%s47] sm:$0xff]
    %v1612 = vld [vmem:[%s47 + $0x8] sm:$0xff]
    %v1613 = vld [vmem:[%s47 + $0x10] sm:$0xff]
    %v1614 = vld [vmem:[%s47 + $0x18] sm:$0xff]
    %v1615 = vld [vmem:[%s49] sm:$0x1]
    %v1617 = vlaneseq
    %v1618 = vshrl.u32 %v1617, 7
    %v1619 = vsub.s32 0, %v1618
    %v1620 = vrot.slane %v1615, %v1619
    %v1623 = vsel %vm1282, %v1610, 0
    %1625 = vmatprep.subr.mxu0 0.0
    %1626 = vmatpush1.msra.mxu0 0.0
    %1627 = vmatprep.subr.mxu0 0.0
    %1628 = vmatpush1.msra.mxu0 0.0
    %1629 = vmatprep.subr.mxu0 0.0
    %1630 = vmatpush1.msra.mxu0 0.0
    %1631 = vmatprep.subr.mxu0 0.0
    %1632 = vmatpush1.msra.mxu0 0.0
    %1633 = vmatprep.subr.mxu0 0.0
    %1634 = vmatpush1.msra.mxu0 0.0
    %1635 = vmatprep.subr.mxu0 0.0
    %1636 = vmatpush1.msra.mxu0 0.0
    %1637 = vmatprep.subr.mxu0 0.0
    %1638 = vmatpush1.msra.mxu0 0.0
    %1639 = vmatprep.subr.mxu0 0.0
    %1640 = vmatpush1.msra.mxu0 0.0
    %1641 = vmatprep.subr.mxu0 0.0
    %1642 = vmatpush1.msra.mxu0 0.0
    %1643 = vmatprep.subr.mxu0 0.0
    %1644 = vmatpush1.msra.mxu0 0.0
    %1645 = vmatprep.subr.mxu0 0.0
    %1646 = vmatpush1.msra.mxu0 0.0
    %1647 = vmatprep.subr.mxu0 0.0
    %1648 = vmatpush1.msra.mxu0 0.0
    %1649 = vmatprep.subr.mxu0 0.0
    %1650 = vmatpush1.msra.mxu0 %v1614
    %1651 = vmatprep.subr.mxu0 0.0
    %1652 = vmatpush1.msra.mxu0 %v1613
    %1653 = vmatprep.subr.mxu0 0.0
    %1654 = vmatpush1.msra.mxu0 %v1612
    %1655 = vmatprep.subr.mxu0 0.0
    %1656 = vmatpush1.msra.mxu0 %v1611
    %1657 = vmatprep.subr.mxu0 0.0
    %1658 = vmatpush2.msra.mxu0 0.0
    %1659 = vmatprep.subr.mxu0 0.0
    %1660 = vmatpush2.msra.mxu0 0.0
    %1661 = vmatprep.subr.mxu0 0.0
    %1662 = vmatpush2.msra.mxu0 0.0
    %1663 = vmatprep.subr.mxu0 0.0
    %1664 = vmatpush2.msra.mxu0 0.0
    %1665 = vmatprep.subr.mxu0 0.0
    %1666 = vmatpush2.msra.mxu0 0.0
    %1667 = vmatprep.subr.mxu0 0.0
    %1668 = vmatpush2.msra.mxu0 0.0
    %1669 = vmatprep.subr.mxu0 0.0
    %1670 = vmatpush2.msra.mxu0 0.0
    %1671 = vmatprep.subr.mxu0 0.0
    %1672 = vmatpush2.msra.mxu0 0.0
    %1673 = vmatprep.subr.mxu0 0.0
    %1674 = vmatpush2.msra.mxu0 0.0
    %1675 = vmatprep.subr.mxu0 0.0
    %1676 = vmatpush2.msra.mxu0 0.0
    %1677 = vmatprep.subr.mxu0 0.0
    %1678 = vmatpush2.msra.mxu0 0.0
    %1679 = vmatprep.subr.mxu0 0.0
    %1680 = vmatpush2.msra.mxu0 0.0
    %1681 = vmatprep.subr.mxu0 0.0
    %1682 = vmatpush2.msra.mxu0 0.0
    %1683 = vmatprep.subr.mxu0 0.0
    %1684 = vmatpush2.msra.mxu0 0.0
    %1685 = vmatprep.subr.mxu0 0.0
    %1686 = vmatpush2.msra.mxu0 0.0
    %1687 = vmatprep.subr.mxu0 0.0
    %1688 = vmatpush2.msra.mxu0 0.0
    %1689 = vmatprep.mubr.f32.mxu0 0.0
    %1690 = vmatmul.mubr.f32.gmra.mxu0 %v1623
    %v1691 = vpop.f32.mrf.mxu0
    %v1692 = vadd.f32 %v1620, %v1691
    %v1693 = vpop.f32.mrf.mxu0
    %1694 = vdwg.mxu0
    %v1695 = vld [vmem:[%s51] sm:$0xff]
    %v1696 = vld [vmem:[%s51 + $0x8] sm:$0xff]
    %v1697 = vld [vmem:[%s51 + $0x10] sm:$0xff]
    %v1698 = vld [vmem:[%s51 + $0x18] sm:$0xff]
    %v1699 = vld [vmem:[%s53] sm:$0x1]
    %v1701 = vlaneseq
    %v1702 = vshrl.u32 %v1701, 7
    %v1703 = vsub.s32 0, %v1702
    %v1704 = vrot.slane %v1699, %v1703
    %v1707 = vsel %vm1282, %v1692, 0
    %1709 = vmatprep.subr.mxu0 0.0
    %1710 = vmatpush1.msra.mxu0 0.0
    %1711 = vmatprep.subr.mxu0 0.0
    %1712 = vmatpush1.msra.mxu0 0.0
    %1713 = vmatprep.subr.mxu0 0.0
    %1714 = vmatpush1.msra.mxu0 0.0
    %1715 = vmatprep.subr.mxu0 0.0
    %1716 = vmatpush1.msra.mxu0 0.0
    %1717 = vmatprep.subr.mxu0 0.0
    %1718 = vmatpush1.msra.mxu0 0.0
    %1719 = vmatprep.subr.mxu0 0.0
    %1720 = vmatpush1.msra.mxu0 0.0
    %1721 = vmatprep.subr.mxu0 0.0
    %1722 = vmatpush1.msra.mxu0 0.0
    %1723 = vmatprep.subr.mxu0 0.0
    %1724 = vmatpush1.msra.mxu0 0.0
    %1725 = vmatprep.subr.mxu0 0.0
    %1726 = vmatpush1.msra.mxu0 0.0
    %1727 = vmatprep.subr.mxu0 0.0
    %1728 = vmatpush1.msra.mxu0 0.0
    %1729 = vmatprep.subr.mxu0 0.0
    %1730 = vmatpush1.msra.mxu0 0.0
    %1731 = vmatprep.subr.mxu0 0.0
    %1732 = vmatpush1.msra.mxu0 0.0
    %1733 = vmatprep.subr.mxu0 0.0
    %1734 = vmatpush1.msra.mxu0 %v1698
    %1735 = vmatprep.subr.mxu0 0.0
    %1736 = vmatpush1.msra.mxu0 %v1697
    %1737 = vmatprep.subr.mxu0 0.0
    %1738 = vmatpush1.msra.mxu0 %v1696
    %1739 = vmatprep.subr.mxu0 0.0
    %1740 = vmatpush1.msra.mxu0 %v1695
    %1741 = vmatprep.subr.mxu0 0.0
    %1742 = vmatpush2.msra.mxu0 0.0
    %1743 = vmatprep.subr.mxu0 0.0
    %1744 = vmatpush2.msra.mxu0 0.0
    %1745 = vmatprep.subr.mxu0 0.0
    %1746 = vmatpush2.msra.mxu0 0.0
    %1747 = vmatprep.subr.mxu0 0.0
    %1748 = vmatpush2.msra.mxu0 0.0
    %1749 = vmatprep.subr.mxu0 0.0
    %1750 = vmatpush2.msra.mxu0 0.0
    %1751 = vmatprep.subr.mxu0 0.0
    %1752 = vmatpush2.msra.mxu0 0.0
    %1753 = vmatprep.subr.mxu0 0.0
    %1754 = vmatpush2.msra.mxu0 0.0
    %1755 = vmatprep.subr.mxu0 0.0
    %1756 = vmatpush2.msra.mxu0 0.0
    %1757 = vmatprep.subr.mxu0 0.0
    %1758 = vmatpush2.msra.mxu0 0.0
    %1759 = vmatprep.subr.mxu0 0.0
    %1760 = vmatpush2.msra.mxu0 0.0
    %1761 = vmatprep.subr.mxu0 0.0
    %1762 = vmatpush2.msra.mxu0 0.0
    %1763 = vmatprep.subr.mxu0 0.0
    %1764 = vmatpush2.msra.mxu0 0.0
    %1765 = vmatprep.subr.mxu0 0.0
    %1766 = vmatpush2.msra.mxu0 0.0
    %1767 = vmatprep.subr.mxu0 0.0
    %1768 = vmatpush2.msra.mxu0 0.0
    %1769 = vmatprep.subr.mxu0 0.0
    %1770 = vmatpush2.msra.mxu0 0.0
    %1771 = vmatprep.subr.mxu0 0.0
    %1772 = vmatpush2.msra.mxu0 0.0
    %1773 = vmatprep.mubr.f32.mxu0 0.0
    %1774 = vmatmul.mubr.f32.gmra.mxu0 %v1707
    %v1775 = vpop.f32.mrf.mxu0
    %v1776 = vadd.f32 %v1704, %v1775
    %v1777 = vpop.f32.mrf.mxu0
    %1778 = vdwg.mxu0
    %v1779 = vld [vmem:[%s55] sm:$0xff]
    %v1780 = vld [vmem:[%s55 + $0x8] sm:$0xff]
    %v1781 = vld [vmem:[%s55 + $0x10] sm:$0xff]
    %v1782 = vld [vmem:[%s55 + $0x18] sm:$0xff]
    %v1783 = vld [vmem:[%s57] sm:$0x1]
    %v1785 = vlaneseq
    %v1786 = vshrl.u32 %v1785, 7
    %v1787 = vsub.s32 0, %v1786
    %v1788 = vrot.slane %v1783, %v1787
    %1790 = vmatprep.subr.mxu0 0.0
    %1791 = vmatpush1.msra.mxu0 0.0
    %1792 = vmatprep.subr.mxu0 0.0
    %1793 = vmatpush1.msra.mxu0 0.0
    %1794 = vmatprep.subr.mxu0 0.0
    %1795 = vmatpush1.msra.mxu0 0.0
    %1796 = vmatprep.subr.mxu0 0.0
    %1797 = vmatpush1.msra.mxu0 0.0
    %1798 = vmatprep.subr.mxu0 0.0
    %1799 = vmatpush1.msra.mxu0 0.0
    %1800 = vmatprep.subr.mxu0 0.0
    %1801 = vmatpush1.msra.mxu0 0.0
    %1802 = vmatprep.subr.mxu0 0.0
    %1803 = vmatpush1.msra.mxu0 0.0
    %1804 = vmatprep.subr.mxu0 0.0
    %1805 = vmatpush1.msra.mxu0 0.0
    %1806 = vmatprep.subr.mxu0 0.0
    %1807 = vmatpush1.msra.mxu0 0.0
    %1808 = vmatprep.subr.mxu0 0.0
    %1809 = vmatpush1.msra.mxu0 0.0
    %1810 = vmatprep.subr.mxu0 0.0
    %1811 = vmatpush1.msra.mxu0 0.0
    %1812 = vmatprep.subr.mxu0 0.0
    %1813 = vmatpush1.msra.mxu0 0.0
    %1814 = vmatprep.subr.mxu0 0.0
    %1815 = vmatpush1.msra.mxu0 %v1782
    %1816 = vmatprep.subr.mxu0 0.0
    %1817 = vmatpush1.msra.mxu0 %v1781
    %1818 = vmatprep.subr.mxu0 0.0
    %1819 = vmatpush1.msra.mxu0 %v1780
    %1820 = vmatprep.subr.mxu0 0.0
    %1821 = vmatpush1.msra.mxu0 %v1779
    %1822 = vmatprep.subr.mxu0 0.0
    %1823 = vmatpush2.msra.mxu0 0.0
    %1824 = vmatprep.subr.mxu0 0.0
    %1825 = vmatpush2.msra.mxu0 0.0
    %1826 = vmatprep.subr.mxu0 0.0
    %1827 = vmatpush2.msra.mxu0 0.0
    %1828 = vmatprep.subr.mxu0 0.0
    %1829 = vmatpush2.msra.mxu0 0.0
    %1830 = vmatprep.subr.mxu0 0.0
    %1831 = vmatpush2.msra.mxu0 0.0
    %1832 = vmatprep.subr.mxu0 0.0
    %1833 = vmatpush2.msra.mxu0 0.0
    %1834 = vmatprep.subr.mxu0 0.0
    %1835 = vmatpush2.msra.mxu0 0.0
    %1836 = vmatprep.subr.mxu0 0.0
    %1837 = vmatpush2.msra.mxu0 0.0
    %1838 = vmatprep.subr.mxu0 0.0
    %1839 = vmatpush2.msra.mxu0 0.0
    %1840 = vmatprep.subr.mxu0 0.0
    %1841 = vmatpush2.msra.mxu0 0.0
    %1842 = vmatprep.subr.mxu0 0.0
    %1843 = vmatpush2.msra.mxu0 0.0
    %1844 = vmatprep.subr.mxu0 0.0
    %1845 = vmatpush2.msra.mxu0 0.0
    %1846 = vmatprep.subr.mxu0 0.0
    %1847 = vmatpush2.msra.mxu0 0.0
    %1848 = vmatprep.subr.mxu0 0.0
    %1849 = vmatpush2.msra.mxu0 0.0
    %1850 = vmatprep.subr.mxu0 0.0
    %1851 = vmatpush2.msra.mxu0 0.0
    %1852 = vmatprep.subr.mxu0 0.0
    %1853 = vmatpush2.msra.mxu0 0.0
    %1854 = vmatprep.mubr.f32.mxu0 0.0
    %1855 = vmatmul.mubr.f32.gmra.mxu0 %v1707
    %v1856 = vpop.f32.mrf.mxu0
    %v1857 = vadd.f32 %v1788, %v1856
    %v1858 = vpop.f32.mrf.mxu0
    %1859 = vdwg.mxu0
    %v1860 = vmin.f32 %v1857, 4.0
    %v1861 = vmul.f32 %v1860, 0.5
    %v1862 = vmul.f32 %v1861, 1.442695
    %v1863 = vpow.pop %v1862
    %vm1864 = vcmask 9216
    %1865 = vst.msk [vmem:[#allocation6] sm:$0x3] %vm1864, %v1776
    %1866 = vst.msk [vmem:[#allocation8] sm:$0x3] %vm1864, %v1863
    %v1867 = vsel %vm1864, %v1863, 0.0
    %1868 = vadd.xlane.f32.xlu0 %v1867
    %v1869 = vpop.xlane.xlu0 %1868
    %v1870 = vrot.slane %v1869, 4
    %v1871 = vadd.f32 %v1869, %v1870
    %v1872 = vrot.slane %v1871, 2
    %v1873 = vadd.f32 %v1871, %v1872
    %v1874 = vrot.slane %v1873, 1
    %v1875 = vadd.f32 %v1873, %v1874
    %s1876 = vtos %v1875
    %v1877 = vstv %s1876
    %v1878 = vrcp.pop 4.0
    %v1879 = vmul.f32 %v1877, %v1878
    %vm1880 = vcmask 0
    %1881 = vst.msk [vmem:[#allocation9] sm:$0x1] %vm1880, %v1879
    %v1882 = vld [vmem:[%s5] sm:$0x3]
    %v1883 = vmul.f32 %v1882, %v1863
    %v1884 = vadd.f32 %v1883, %v1776
    %1885 = vst.msk [vmem:[#allocation5] sm:$0x3] %vm1864, %v1884
    // Predicated region
    $region122: #{_lambda_.1} parent=1 // pred_check
      _
    $region123: #{_lambda_.1} parent=1 // pred_check_branch
      %1887 = sbr.rel (0) target = $region125
    $region124: #{_lambda_.1} parent=1 // pred_region
      %s1889 = ssub.s32 32, 32
      %1890 = vsyncadd [#allocation4], %s1889
      %s1892 = sshll.u32 [#allocation5], 4
      %s1893 = int_to_ptr.vmem [resolvable:$true] %s1892
      %1895 = dma.vmem_to_hbm [thread:$0]  %s1893, 32, %s59, [#allocation4]
    $region125: #{_lambda_.1} parent=1 // pred_fallthru
      _
    // Predicated region
    $region126: #{_lambda_.1} parent=1 // pred_check
      _
    $region127: #{_lambda_.1} parent=1 // pred_check_branch
      %1897 = sbr.rel (0) target = $region129
    $region128: #{_lambda_.1} parent=1 // pred_region
      %s1899 = ssub.s32 32, 32
      %1900 = vsyncadd [#allocation7], %s1899
      %s1902 = sshll.u32 [#allocation6], 4
      %s1903 = int_to_ptr.vmem [resolvable:$true] %s1902
      %1905 = dma.vmem_to_hbm [thread:$0]  %s1903, 32, %s61, [#allocation7]
    $region129: #{_lambda_.1} parent=1 // pred_fallthru
      _
    // Predicated region
    $region130: #{_lambda_.1} parent=1 // pred_check
      _
    $region131: #{_lambda_.1} parent=1 // pred_check_branch
      %1907 = sbr.rel (0) target = $region133
    $region132: #{_lambda_.1} parent=1 // pred_region
      %s1909 = ssub.s32 32, 32
      %1910 = vsyncadd [#allocation7], %s1909
      %s1912 = sshll.u32 [#allocation8], 4
      %s1913 = int_to_ptr.vmem [resolvable:$true] %s1912
      %1915 = dma.vmem_to_hbm [thread:$0]  %s1913, 32, %s63, [#allocation7]
    $region133: #{_lambda_.1} parent=1 // pred_fallthru
      _
    // Predicated region
    $region134: #{_lambda_.1} parent=1 // pred_check
      _
    $region135: #{_lambda_.1} parent=1 // pred_check_branch
      %1917 = sbr.rel (0) target = $region137
    $region136: #{_lambda_.1} parent=1 // pred_region
      %s1919 = ssub.s32 16, 16
      %1920 = vsyncadd [#allocation10], %s1919
      %s1922 = sshll.u32 [#allocation9], 4
      %s1923 = int_to_ptr.vmem [resolvable:$true] %s1922
      %1925 = dma.vmem_to_hbm [thread:$0]  %s1923, 16, %s65, [#allocation10]
    $region137: #{_lambda_.1} parent=1 // pred_fallthru
      _
    // Predicated region
    $region138: #{_lambda_.1} parent=1 // pred_check
      _
    $region139: #{_lambda_.1} parent=1 // pred_check_branch
      %1927 = sbr.rel (0) target = $region141
    $region140: #{_lambda_.1} parent=1 // pred_region
      %1928 = dma.done [#allocation4], 32
    $region141: #{_lambda_.1} parent=1 // pred_fallthru
      _
    // Predicated region
    $region142: #{_lambda_.1} parent=1 // pred_check
      _
    $region143: #{_lambda_.1} parent=1 // pred_check_branch
      %1930 = sbr.rel (0) target = $region145
    $region144: #{_lambda_.1} parent=1 // pred_region
      %1931 = dma.done [#allocation7], 32
    $region145: #{_lambda_.1} parent=1 // pred_fallthru
      _
    // Predicated region
    $region146: #{_lambda_.1} parent=1 // pred_check
      _
    $region147: #{_lambda_.1} parent=1 // pred_check_branch
      %1933 = sbr.rel (0) target = $region149
    $region148: #{_lambda_.1} parent=1 // pred_region
      %1934 = dma.done [#allocation7], 32
    $region149: #{_lambda_.1} parent=1 // pred_fallthru
      _
    // Predicated region
    $region150: #{_lambda_.1} parent=1 // pred_check
      _
    $region151: #{_lambda_.1} parent=1 // pred_check_branch
      %1936 = sbr.rel (0) target = $region153
    $region152: #{_lambda_.1} parent=1 // pred_region
      %1937 = dma.done [#allocation10], 16
    $region153: #{_lambda_.1} parent=1 // pred_fallthru
      _
    %1938 = vsyncpa [#allocation3], 1
    %1939 = vsyncpa [#allocation4], 1
    %1940 = vsyncpa [#allocation7], 1
    %1941 = vsyncpa [#allocation10], 1

</llo_original>
